<compile_context>
chip_gen: v5e
topology: v5e:2x2
jax: 0.10.0
libtpu: 0.0.40
codegen_flags: <defaults>
</compile_context>

<pallas_src>
import functools

import jax
import jax.numpy as jnp
from jax.experimental import pallas as pl
from jax.experimental.pallas import tpu as pltpu

_MiB = 1024 * 1024


# ---------------------------------------------------------------------------
# Kernels
# ---------------------------------------------------------------------------
def _se_fused_kernel(x_ref, w1_ref, b1_ref, w2_ref, b2_ref, o_ref):
    """Single-pass SE: pool + FC + rescale on a (bt, C, HW) block."""
    xv = x_ref[...]                                             # (bt, C, HW)
    inv_hw = 1.0 / x_ref.shape[2]

    # Squeeze: global average pool over the spatial (lane) axis, f32 accum.
    y = jnp.sum(xv.astype(jnp.float32), axis=2) * inv_hw        # (bt, C)

    # Excitation: Linear -> ReLU -> Linear -> Sigmoid.  Tiny matmuls; MXU/EUP
    # have enormous slack under the DMA bound, so no restructuring needed.
    h = jnp.dot(y, w1_ref[...], preferred_element_type=jnp.float32) + b1_ref[...]
    h = jnp.maximum(h, 0.0)                                     # (bt, hidden)
    s = jnp.dot(h, w2_ref[...], preferred_element_type=jnp.float32) + b2_ref[...]
    s = jax.nn.sigmoid(s)                                       # (bt, C)

    # Scale: per-channel rescale, broadcast along the lane (HW) axis.
    o_ref[...] = (xv * s.astype(xv.dtype)[:, :, None]).astype(o_ref.dtype)


def _se_pool_kernel(x_ref, y_ref):
    """Two-pass path, pass 1: per-channel-tile global average pool."""
    xv = x_ref[...].astype(jnp.float32)                         # (bt, ct, HW)
    inv_hw = 1.0 / x_ref.shape[2]
    y_ref[...] = (jnp.sum(xv, axis=2) * inv_hw)[:, None, :]     # (bt, 1, ct)


def _se_scale_kernel(x_ref, s_ref, o_ref):
    """Two-pass path, pass 2: per-channel rescale of a (bt, ct, HW) block."""
    xv = x_ref[...]
    bt, _, ct = s_ref.shape
    scale = s_ref[...].reshape(bt, ct).astype(xv.dtype)[:, :, None]
    o_ref[...] = (xv * scale).astype(o_ref.dtype)


# ---------------------------------------------------------------------------
# Sizing helpers
# ---------------------------------------------------------------------------
def _round_up(n, m):
    return ((n + m - 1) // m) * m


def _padded_vmem_bytes(shape, itemsize):
    """Rough padded VMEM footprint of a small array (last dims -> 8 x 128)."""
    if len(shape) == 0:
        return 8 * 128 * itemsize
    if len(shape) == 1:
        return 8 * _round_up(shape[0], 128) * itemsize
    lead = 1
    for d in shape[:-2]:
        lead *= int(d)
    return lead * _round_up(shape[-2], 8) * _round_up(shape[-1], 128) * itemsize


def _vmem_capacity_bytes():
    try:
        return int(pltpu.get_tpu_info().vmem_capacity_bytes)
    except Exception:
        return 64 * _MiB            # conservative default: v7x-sized VMEM


def _largest_divisor_leq(n, limit):
    limit = max(1, min(n, limit))
    for d in range(limit, 0, -1):
        if n % d == 0:
            return d
    return 1


def _pick_batch_tile(batch, bytes_per_item, block_budget, min_steps=2):
    """Largest divisor of `batch` whose block fits `block_budget`; reduced only
    as far as needed for >= min_steps grid steps (v7x has 2 TensorCores) and
    never shrunk further just to manufacture extra pipeline steps."""
    bt = _largest_divisor_leq(batch, block_budget // max(bytes_per_item, 1))
    if batch // bt < min_steps and batch >= min_steps:
        bt = _largest_divisor_leq(batch, batch // min_steps)
    return bt


def _pick_channel_tile(channels, bytes_per_channel, block_budget):
    """Largest divisor of `channels` that is a multiple of 128 (keeps both the
    (bt, ct, HW) x blocks and the (bt, 1, ct) scale blocks aligned) whose block
    fits the budget; best-effort smallest valid tile otherwise."""
    candidates = [channels] + [d for d in range(128, channels, 128)
                               if channels % d == 0]
    fitting = [d for d in candidates if d * bytes_per_channel <= block_budget]
    if fitting:
        return max(fitting)
    return min(candidates)          # best effort for extreme shapes


# ---------------------------------------------------------------------------
# Wrapper
# ---------------------------------------------------------------------------
def _se_fused(x3, w1, b1, w2, b2, block_budget, param_vmem, param_io,
              vmem_budget):
    B, C, HW = x3.shape
    hidden = w1.shape[1]
    itemsize = jnp.dtype(x3.dtype).itemsize

    per_image_bytes = C * HW * itemsize
    bt = _pick_batch_tile(B, per_image_bytes, block_budget)
    block_bytes = bt * per_image_bytes

    # Footprint-derived scoped VMEM: 2x in + 2x out blocks + params + headroom.
    vmem_limit = int(min(vmem_budget,
                         max(32 * _MiB,
                             4 * block_bytes + 2 * param_vmem + 2 * _MiB)))

    cost = pl.CostEstimate(
        flops=2 * B * C * HW + 4 * B * C * hidden,
        transcendentals=B * C,
        bytes_accessed=2 * B * C * HW * itemsize + param_io,
    )

    return pl.pallas_call(
        _se_fused_kernel,
        out_shape=jax.ShapeDtypeStruct((B, C, HW), x3.dtype),
        grid_spec=pltpu.PrefetchScalarGridSpec(
            num_scalar_prefetch=0,
            grid=(B // bt,),
            in_specs=[
                pl.BlockSpec((bt, C, HW), lambda b: (b, 0, 0)),
                pl.BlockSpec((C, hidden), lambda b: (0, 0)),
                pl.BlockSpec((1, hidden), lambda b: (0, 0)),
                pl.BlockSpec((hidden, C), lambda b: (0, 0)),
                pl.BlockSpec((1, C), lambda b: (0, 0)),
            ],
            out_specs=pl.BlockSpec((bt, C, HW), lambda b: (b, 0, 0)),
        ),
        compiler_params=pltpu.CompilerParams(
            dimension_semantics=("parallel",),
            vmem_limit_bytes=vmem_limit,
        ),
        cost_estimate=cost,
    )(x3, w1, b1, w2, b2)


def _se_two_pass(x3, w1, b1, w2, b2, block_budget, vmem_budget):
    B, C, HW = x3.shape
    itemsize = jnp.dtype(x3.dtype).itemsize

    # TODO(synk): if C has no 128-multiple divisor and a full-C block still
    # exceeds the budget (tiny-C / huge-HW shapes), add spatial tiling of HW.
    bytes_per_channel = HW * itemsize
    ct = _pick_channel_tile(C, bytes_per_channel, block_budget)
    bt = _pick_batch_tile(B, ct * bytes_per_channel, block_budget, min_steps=1)
    block_bytes = bt * ct * bytes_per_channel
    n_b, n_c = B // bt, C // ct

    pool_limit = int(min(vmem_budget, max(32 * _MiB, 3 * block_bytes + 2 * _MiB)))
    scale_limit = int(min(vmem_budget, max(32 * _MiB, 4 * block_bytes + 4 * _MiB)))

    # Pass 1: per-channel-tile global average pool (both grid axes parallel).
    y = pl.pallas_call(
        _se_pool_kernel,
        out_shape=jax.ShapeDtypeStruct((B, 1, C), jnp.float32),
        grid_spec=pltpu.PrefetchScalarGridSpec(
            num_scalar_prefetch=0,
            grid=(n_b, n_c),
            in_specs=[pl.BlockSpec((bt, ct, HW), lambda b, c: (b, c, 0))],
            out_specs=pl.BlockSpec((bt, 1, ct), lambda b, c: (b, 0, c)),
        ),
        compiler_params=pltpu.CompilerParams(
            dimension_semantics=("parallel", "parallel"),
            vmem_limit_bytes=pool_limit,
        ),
        cost_estimate=pl.CostEstimate(
            flops=B * C * HW, transcendentals=0,
            bytes_accessed=B * C * HW * itemsize + B * C * 4),
    )(x3)

    # Tiny excitation FC on the pooled (B, C) vector: plain XLA ops are
    # negligible next to the two full HBM sweeps over x.
    h = jnp.maximum(jnp.dot(y.reshape(B, C), w1,
                            preferred_element_type=jnp.float32) + b1, 0.0)
    s = jax.nn.sigmoid(jnp.dot(h, w2, preferred_element_type=jnp.float32) + b2)
    s = s.reshape(B, 1, C).astype(jnp.float32)

    # Pass 2: per-channel rescale over the same channel tiles.
    return pl.pallas_call(
        _se_scale_kernel,
        out_shape=jax.ShapeDtypeStruct((B, C, HW), x3.dtype),
        grid_spec=pltpu.PrefetchScalarGridSpec(
            num_scalar_prefetch=0,
            grid=(n_b, n_c),
            in_specs=[
                pl.BlockSpec((bt, ct, HW), lambda b, c: (b, c, 0)),
                pl.BlockSpec((bt, 1, ct), lambda b, c: (b, 0, c)),
            ],
            out_specs=pl.BlockSpec((bt, ct, HW), lambda b, c: (b, c, 0)),
        ),
        compiler_params=pltpu.CompilerParams(
            dimension_semantics=("parallel", "parallel"),
            vmem_limit_bytes=scale_limit,
        ),
        cost_estimate=pl.CostEstimate(
            flops=B * C * HW, transcendentals=0,
            bytes_accessed=2 * B * C * HW * itemsize + B * C * 4),
    )(x3, s)


@functools.partial(jax.jit, static_argnames=("block_budget_override",))
def se_module(x, w1, b1, w2, b2, *, block_budget_override=None):
    """SEModule forward.  x: (B, C, H, W); w1: (C, C//r) == fc1.weight.T;
    b1: (C//r,); w2: (C//r, C) == fc2.weight.T; b2: (C,)."""
    B, C, H, W = x.shape
    HW = H * W
    hidden = w1.shape[1]
    itemsize = jnp.dtype(x.dtype).itemsize

    b1_2d = b1.reshape(1, hidden)
    b2_2d = b2.reshape(1, C)

    param_vmem = sum(_padded_vmem_bytes(a.shape, jnp.dtype(a.dtype).itemsize)
                     for a in (w1, b1_2d, w2, b2_2d))
    param_io = sum(a.size * jnp.dtype(a.dtype).itemsize
                   for a in (w1, b1_2d, w2, b2_2d))

    # Per-generation VMEM budget (v7x: ~48 MiB of 64; v5e/v6e: ~96 of 128).
    vmem_budget = min(_vmem_capacity_bytes() * 3 // 4, 112 * _MiB)
    # 2x double-buffered input + 2x output blocks (+ margin) must fit.
    block_budget = max((vmem_budget - 2 * param_vmem - 4 * _MiB) // 5, 512 * 1024)
    if block_budget_override is not None:
        block_budget = int(block_budget_override)

    x3 = x.reshape(B, C, HW)          # free: NCHW is contiguous over (H, W)
    per_image_bytes = C * HW * itemsize

    if per_image_bytes <= block_budget:
        out = _se_fused(x3, w1, b1_2d, w2, b2_2d, block_budget, param_vmem,
                        param_io, vmem_budget)
    else:
        out = _se_two_pass(x3, w1, b1_2d, w2, b2_2d, block_budget, vmem_budget)
    return out.reshape(B, C, H, W)


# ---------------------------------------------------------------------------
# Reference + self-test
# ---------------------------------------------------------------------------
def _reference(x, w1, b1, w2, b2):
    y = jnp.mean(x, axis=(2, 3))                       # adaptive avg pool
    y = jnp.maximum(y @ w1 + b1, 0.0)                  # Linear + ReLU
    y = jax.nn.sigmoid(y @ w2 + b2)                    # Linear + Sigmoid
    return x * y[:, :, None, None]


if __name__ == "__main__":
    # Shapes consistent with SEModule(channels=256, reduction=16).
    B, C, H, W = 4, 256, 8, 8
    reduction = 16
    hidden = C // reduction

    key = jax.random.PRNGKey(0)
    kx, k1, k2, k3, k4 = jax.random.split(key, 5)
    x = jax.random.normal(kx, (B, C, H, W), dtype=jnp.float32)
    # Synthetic params (w1 == fc1.weight.T, w2 == fc2.weight.T).
    w1 = jax.random.normal(k1, (C, hidden), dtype=jnp.float32) * 0.1
    b1 = jax.random.normal(k2, (hidden,), dtype=jnp.float32) * 0.1
    w2 = jax.random.normal(k3, (hidden, C), dtype=jnp.float32) * 0.1
    b2 = jax.random.normal(k4, (C,), dtype=jnp.float32) * 0.1

    ref = _reference(x, w1, b1, w2, b2)

    # Fused single-pass path (whole (C, H*W) image block fits the VMEM budget).
    out = se_module(x, w1, b1, w2, b2)
    jax.block_until_ready(out)
    assert out.shape == (B, C, H, W)
    assert jnp.allclose(out, ref, atol=1e-5, rtol=1e-5), "fused path mismatch"

    # Channel-tiled two-pass path (forced small block budget, exercising the
    # fallback used when a whole image block would blow VMEM, e.g. on v7x).
    out2 = se_module(x, w1, b1, w2, b2, block_budget_override=32 * 1024)
    jax.block_until_ready(out2)
    assert jnp.allclose(out2, ref, atol=1e-5, rtol=1e-5), "two-pass path mismatch"

    print("KERNEL_OK")
</pallas_src>

<mosaic_0001>
module attributes {stable_mosaic.version = 11 : i64} {
  func.func @_se_fused_kernel(%arg0: i32, %arg1: memref<2x256x64xf32, #tpu.memory_space<vmem>>, %arg2: memref<256x16xf32, #tpu.memory_space<vmem>>, %arg3: memref<1x16xf32, #tpu.memory_space<vmem>>, %arg4: memref<16x256xf32, #tpu.memory_space<vmem>>, %arg5: memref<1x256xf32, #tpu.memory_space<vmem>>, %arg6: memref<2x256x64xf32, #tpu.memory_space<vmem>>) attributes {dimension_semantics = [#tpu.dimension_semantics<parallel>], iteration_bounds = array<i64: 2>, scalar_prefetch = 0 : i64, scratch_operands = 0 : i64, tpu.core_type = #tpu.core_type<tc>, window_params = [{transform_indices = @transform_0, window_bounds = array<i64: 2, 256, 64>}, {pipeline_mode = #tpu.pipeline_mode<synchronous>, transform_indices = @transform_1, window_bounds = array<i64: 256, 16>}, {pipeline_mode = #tpu.pipeline_mode<synchronous>, transform_indices = @transform_2, window_bounds = array<i64: 1, 16>}, {pipeline_mode = #tpu.pipeline_mode<synchronous>, transform_indices = @transform_3, window_bounds = array<i64: 16, 256>}, {pipeline_mode = #tpu.pipeline_mode<synchronous>, transform_indices = @transform_4, window_bounds = array<i64: 1, 256>}, {transform_indices = @transform_5, window_bounds = array<i64: 2, 256, 64>}]} {
    %c0 = arith.constant 0 : index
    %c0_0 = arith.constant 0 : index
    %c0_1 = arith.constant 0 : index
    %0 = vector.load %arg1[%c0, %c0_0, %c0_1] : memref<2x256x64xf32, #tpu.memory_space<vmem>>, vector<2x256x64xf32>
    %cst = arith.constant dense<0.000000e+00> : vector<2x256xf32>
    %1 = vector.multi_reduction <add>, %0, %cst [2] : vector<2x256x64xf32> to vector<2x256xf32>
    %cst_2 = arith.constant 1.562500e-02 : f32
    %2 = vector.broadcast %cst_2 : f32 to vector<2x256xf32>
    %3 = arith.mulf %1, %2 : vector<2x256xf32>
    %c0_3 = arith.constant 0 : index
    %c0_4 = arith.constant 0 : index
    %4 = vector.load %arg2[%c0_3, %c0_4] : memref<256x16xf32, #tpu.memory_space<vmem>>, vector<256x16xf32>
    %cst_5 = arith.constant dense<0.000000e+00> : vector<2x16xf32>
    %5 = tpu.matmul %3, %4, %cst_5 {dimension_numbers = #tpu.dot_dimension_numbers<[1], [0], [0], [1], [0, 0, 1, 1], [], []>} : vector<2x256xf32>, vector<256x16xf32>, vector<2x16xf32> -> vector<2x16xf32>
    %c0_6 = arith.constant 0 : index
    %c0_7 = arith.constant 0 : index
    %6 = vector.load %arg3[%c0_6, %c0_7] : memref<1x16xf32, #tpu.memory_space<vmem>>, vector<1x16xf32>
    %7 = vector.broadcast %6 : vector<1x16xf32> to vector<2x16xf32>
    %8 = arith.addf %5, %7 : vector<2x16xf32>
    %cst_8 = arith.constant 0.000000e+00 : f32
    %9 = vector.broadcast %cst_8 : f32 to vector<2x16xf32>
    %10 = arith.maximumf %8, %9 : vector<2x16xf32>
    %c0_9 = arith.constant 0 : index
    %c0_10 = arith.constant 0 : index
    %11 = vector.load %arg4[%c0_9, %c0_10] : memref<16x256xf32, #tpu.memory_space<vmem>>, vector<16x256xf32>
    %cst_11 = arith.constant dense<0.000000e+00> : vector<2x256xf32>
    %12 = tpu.matmul %10, %11, %cst_11 {dimension_numbers = #tpu.dot_dimension_numbers<[1], [0], [0], [1], [0, 0, 1, 1], [], []>} : vector<2x16xf32>, vector<16x256xf32>, vector<2x256xf32> -> vector<2x256xf32>
    %c0_12 = arith.constant 0 : index
    %c0_13 = arith.constant 0 : index
    %13 = vector.load %arg5[%c0_12, %c0_13] : memref<1x256xf32, #tpu.memory_space<vmem>>, vector<1x256xf32>
    %14 = vector.broadcast %13 : vector<1x256xf32> to vector<2x256xf32>
    %15 = arith.addf %12, %14 : vector<2x256xf32>
    %16 = arith.negf %15 : vector<2x256xf32>
    %17 = math.exp %16 : vector<2x256xf32>
    %cst_14 = arith.constant 1.000000e+00 : f32
    %18 = vector.broadcast %cst_14 : f32 to vector<2x256xf32>
    %19 = arith.addf %18, %17 : vector<2x256xf32>
    %20 = arith.divf %18, %19 : vector<2x256xf32>
    %21 = vector.shape_cast %20 : vector<2x256xf32> to vector<2x256x1xf32>
    %22 = vector.broadcast %21 : vector<2x256x1xf32> to vector<2x256x64xf32>
    %23 = arith.mulf %0, %22 : vector<2x256x64xf32>
    %c0_15 = arith.constant 0 : index
    %c0_16 = arith.constant 0 : index
    %c0_17 = arith.constant 0 : index
    %24 = vector.load %arg6[%c0_15, %c0_16, %c0_17] : memref<2x256x64xf32, #tpu.memory_space<vmem>>, vector<2x256x64xf32>
    tpu.vector_store %arg6[%c0_15, %c0_16, %c0_17], %23 {strides = array<i32>} : memref<2x256x64xf32, #tpu.memory_space<vmem>>, vector<2x256x64xf32>,
    return
  }
  func.func @transform_0(%arg0: i32) -> (i32, i32, i32) {
    %c0_i32 = arith.constant 0 : i32
    %c0_i32_0 = arith.constant 0 : i32
    %c0_i32_1 = arith.constant 0 : i32
    return %arg0, %c0_i32, %c0_i32_0 : i32, i32, i32
  }
  func.func @transform_1(%arg0: i32) -> (i32, i32) {
    %c0_i32 = arith.constant 0 : i32
    %c0_i32_0 = arith.constant 0 : i32
    %c0_i32_1 = arith.constant 0 : i32
    return %c0_i32, %c0_i32_0 : i32, i32
  }
  func.func @transform_2(%arg0: i32) -> (i32, i32) {
    %c0_i32 = arith.constant 0 : i32
    %c0_i32_0 = arith.constant 0 : i32
    %c0_i32_1 = arith.constant 0 : i32
    return %c0_i32, %c0_i32_0 : i32, i32
  }
  func.func @transform_3(%arg0: i32) -> (i32, i32) {
    %c0_i32 = arith.constant 0 : i32
    %c0_i32_0 = arith.constant 0 : i32
    %c0_i32_1 = arith.constant 0 : i32
    return %c0_i32, %c0_i32_0 : i32, i32
  }
  func.func @transform_4(%arg0: i32) -> (i32, i32) {
    %c0_i32 = arith.constant 0 : i32
    %c0_i32_0 = arith.constant 0 : i32
    %c0_i32_1 = arith.constant 0 : i32
    return %c0_i32, %c0_i32_0 : i32, i32
  }
  func.func @transform_5(%arg0: i32) -> (i32, i32, i32) {
    %c0_i32 = arith.constant 0 : i32
    %c0_i32_0 = arith.constant 0 : i32
    %c0_i32_1 = arith.constant 0 : i32
    return %arg0, %c0_i32, %c0_i32_0 : i32, i32, i32
  }
}

</mosaic_0001>

<llo_original>
// kernel: se_module.1
$region0: #{se_module.1}
  #allocation0 [shape = 'u32[]', space=smem, size = 0x4, offset = 0x4, fixed_abs, tag = 'smem constant byte address 0x4 - core index']
  #allocation1 [shape = 'u32[72,128]{1,0:T(1,128)}', space=vmem, size = 0x9000, scoped, tag = 'internal scratch']
  %s0 = inlined_call_operand.vmem [shape: f32[4,256,64], index: 0, kind: input, shape index: {}]
  %s1 = inlined_call_operand.vmem [shape: f32[256,16], index: 1, kind: input, shape index: {}]
  %s2 = inlined_call_operand.vmem [shape: f32[1,16], index: 2, kind: input, shape index: {}]
  %s3 = inlined_call_operand.vmem [shape: f32[16,256], index: 3, kind: input, shape index: {}]
  %s4 = inlined_call_operand.vmem [shape: f32[1,256], index: 4, kind: input, shape index: {}]
  %s5 = inlined_call_operand.vmem [shape: f32[4,256,64], index: 5, kind: output, shape index: {}]
  %s6 = sld [smem:[#allocation0]]
  $region53: #{se_module.1} parent=0
    _
  %s8 = ssub.s32 1, %s6
  %s9 = scalar_select 0, %s8, %s6
  loop: start=0, step=1, limit=4
  $region2: #{se_module.1} parent=0 // loop_pre_header
    _
  $region3: #{se_module.1} parent=0 // loop_header
    %s11 = sphi 0, %s15
    %p12 = scmp.ge.s32.totalorder %s11, 4
    %s21 = sphi 0, %s23
    %s24 = sphi 0, %s21
    %s25 = sphi 0, %s24
    %s41 = sphi 0, %s25
    %s45 = sphi 0, %s45
    %s47 = sphi 0, %s45
    %s48 = sphi 0, %s47
    %s62 = sphi 0, %s48
    %s66 = sphi 0, %s66
    %s68 = sphi 0, %s66
    %s69 = sphi 0, %s68
    %s83 = sphi 0, %s69
    %s87 = sphi 0, %s87
    %s89 = sphi 0, %s87
    %s90 = sphi 0, %s89
    %s104 = sphi 0, %s90
    %s108 = sphi 0, %s108
    %s110 = sphi 0, %s108
    %s111 = sphi 0, %s110
    %s125 = sphi 0, %s111
    %s131 = sphi 0, %s133
    %s134 = sphi 0, %s131
    %s135 = sphi 0, %s134
    %s151 = sphi 0, %s135
  $region4: #{se_module.1} parent=0 // loop_header_branch
    %14 = sbr.rel (%p12) target = $region8
  $region5: #{se_module.1} parent=0 // loop_body
    %s16 = ssub.s32 %s11, 1
    %s17 = ssub.s32 %s11, 2
    %s18 = sadd.s32 %s11, 1
    %s19 = ssub.s32 %s11, %s18
    %p20 = scmp.eq.s32.totalorder %s19, 0
    %s22 = sadd.s32 %s21, 1
    %s23 = scalar_select %p20, %s21, %s22
    %p26 = pneg %p20
    %p27 = scmp.eq.s32.totalorder %s11, 1
    %p28 = por %p26, %p27
    %p29 = scmp.ne.s32.totalorder %s21, %s24
    %p30 = scmp.eq.s32.totalorder %s11, 0
    %p31 = por %p29, %p30
    %p32 = scmp.ne.s32.totalorder %s21, %s24
    %p33 = scmp.eq.s32.totalorder %s16, 1
    %p34 = por %p32, %p33
    %p35 = scmp.ne.s32.totalorder %s24, %s25
    %p36 = scmp.eq.s32.totalorder %s16, 0
    %p37 = por %p35, %p36
    %p38 = scmp.ne.s32.totalorder %s24, %s25
    %p39 = scmp.eq.s32.totalorder %s17, 1
    %p40 = por %p38, %p39
    %p42 = scmp.ne.s32.totalorder %s25, %s41
    %p43 = scmp.eq.s32.totalorder %s17, 0
    %p44 = por %p42, %p43
    %s46 = sadd.s32 %s45, 1
    %p49 = scmp.eq.s32.totalorder %s11, 1
    %p50 = scmp.ne.s32.totalorder %s45, %s47
    %p51 = scmp.eq.s32.totalorder %s11, 0
    %p52 = por %p50, %p51
    %p53 = scmp.ne.s32.totalorder %s45, %s47
    %p54 = scmp.eq.s32.totalorder %s16, 1
    %p55 = por %p53, %p54
    %p56 = scmp.ne.s32.totalorder %s47, %s48
    %p57 = scmp.eq.s32.totalorder %s16, 0
    %p58 = por %p56, %p57
    %p59 = scmp.ne.s32.totalorder %s47, %s48
    %p60 = scmp.eq.s32.totalorder %s17, 1
    %p61 = por %p59, %p60
    %p63 = scmp.ne.s32.totalorder %s48, %s62
    %p64 = scmp.eq.s32.totalorder %s17, 0
    %p65 = por %p63, %p64
    %s67 = sadd.s32 %s66, 1
    %p70 = scmp.eq.s32.totalorder %s11, 1
    %p71 = scmp.ne.s32.totalorder %s66, %s68
    %p72 = scmp.eq.s32.totalorder %s11, 0
    %p73 = por %p71, %p72
    %p74 = scmp.ne.s32.totalorder %s66, %s68
    %p75 = scmp.eq.s32.totalorder %s16, 1
    %p76 = por %p74, %p75
    %p77 = scmp.ne.s32.totalorder %s68, %s69
    %p78 = scmp.eq.s32.totalorder %s16, 0
    %p79 = por %p77, %p78
    %p80 = scmp.ne.s32.totalorder %s68, %s69
    %p81 = scmp.eq.s32.totalorder %s17, 1
    %p82 = por %p80, %p81
    %p84 = scmp.ne.s32.totalorder %s69, %s83
    %p85 = scmp.eq.s32.totalorder %s17, 0
    %p86 = por %p84, %p85
    %s88 = sadd.s32 %s87, 1
    %p91 = scmp.eq.s32.totalorder %s11, 1
    %p92 = scmp.ne.s32.totalorder %s87, %s89
    %p93 = scmp.eq.s32.totalorder %s11, 0
    %p94 = por %p92, %p93
    %p95 = scmp.ne.s32.totalorder %s87, %s89
    %p96 = scmp.eq.s32.totalorder %s16, 1
    %p97 = por %p95, %p96
    %p98 = scmp.ne.s32.totalorder %s89, %s90
    %p99 = scmp.eq.s32.totalorder %s16, 0
    %p100 = por %p98, %p99
    %p101 = scmp.ne.s32.totalorder %s89, %s90
    %p102 = scmp.eq.s32.totalorder %s17, 1
    %p103 = por %p101, %p102
    %p105 = scmp.ne.s32.totalorder %s90, %s104
    %p106 = scmp.eq.s32.totalorder %s17, 0
    %p107 = por %p105, %p106
    %s109 = sadd.s32 %s108, 1
    %p112 = scmp.eq.s32.totalorder %s11, 1
    %p113 = scmp.ne.s32.totalorder %s108, %s110
    %p114 = scmp.eq.s32.totalorder %s11, 0
    %p115 = por %p113, %p114
    %p116 = scmp.ne.s32.totalorder %s108, %s110
    %p117 = scmp.eq.s32.totalorder %s16, 1
    %p118 = por %p116, %p117
    %p119 = scmp.ne.s32.totalorder %s110, %s111
    %p120 = scmp.eq.s32.totalorder %s16, 0
    %p121 = por %p119, %p120
    %p122 = scmp.ne.s32.totalorder %s110, %s111
    %p123 = scmp.eq.s32.totalorder %s17, 1
    %p124 = por %p122, %p123
    %p126 = scmp.ne.s32.totalorder %s111, %s125
    %p127 = scmp.eq.s32.totalorder %s17, 0
    %p128 = por %p126, %p127
    %s129 = ssub.s32 %s11, %s18
    %p130 = scmp.eq.s32.totalorder %s129, 0
    %s132 = sadd.s32 %s131, 1
    %s133 = scalar_select %p130, %s131, %s132
    %p136 = pneg %p130
    %p137 = scmp.eq.s32.totalorder %s11, 1
    %p138 = por %p136, %p137
    %p139 = scmp.ne.s32.totalorder %s131, %s134
    %p140 = scmp.eq.s32.totalorder %s11, 0
    %p141 = por %p139, %p140
    %p142 = scmp.ne.s32.totalorder %s131, %s134
    %p143 = scmp.eq.s32.totalorder %s16, 1
    %p144 = por %p142, %p143
    %p145 = scmp.ne.s32.totalorder %s134, %s135
    %p146 = scmp.eq.s32.totalorder %s16, 0
    %p147 = por %p145, %p146
    %p148 = scmp.ne.s32.totalorder %s134, %s135
    %p149 = scmp.eq.s32.totalorder %s17, 1
    %p150 = por %p148, %p149
    %p152 = scmp.ne.s32.totalorder %s135, %s151
    %p153 = scmp.eq.s32.totalorder %s17, 0
    %p154 = por %p152, %p153
    %p155 = scmp.le.s32.totalorder 1, %s11
    %p156 = scmp.lt.s32.totalorder %s11, 3
    %p157 = pnand %p155, %p156
    %p158 = pneg %p157
    // Predicated region
    $region9: #{se_module.1} parent=5 // pred_check
      _
    $region10: #{se_module.1} parent=5 // pred_check_branch
      %160 = sbr.rel (%p157) target = $region12
    $region11: #{se_module.1} parent=5 // pred_region
      %s161 = ssub.s32 %s11, 1
      // Predicated region
      $region13: #{se_module.1} parent=11 // pred_check
        %p162 = pneg %p58
      $region14: #{se_module.1} parent=11 // pred_check_branch
        %164 = sbr.rel (%p162) target = $region16
      $region15: #{se_module.1} parent=11 // pred_region
        _
      $region16: #{se_module.1} parent=11 // pred_fallthru
        _
      // Predicated region
      $region17: #{se_module.1} parent=11 // pred_check
        %p165 = pneg %p79
      $region18: #{se_module.1} parent=11 // pred_check_branch
        %167 = sbr.rel (%p165) target = $region20
      $region19: #{se_module.1} parent=11 // pred_region
        _
      $region20: #{se_module.1} parent=11 // pred_fallthru
        _
      // Predicated region
      $region21: #{se_module.1} parent=11 // pred_check
        %p168 = pneg %p100
      $region22: #{se_module.1} parent=11 // pred_check_branch
        %170 = sbr.rel (%p168) target = $region24
      $region23: #{se_module.1} parent=11 // pred_region
        _
      $region24: #{se_module.1} parent=11 // pred_fallthru
        _
      // Predicated region
      $region25: #{se_module.1} parent=11 // pred_check
        %p171 = pneg %p121
      $region26: #{se_module.1} parent=11 // pred_check_branch
        %173 = sbr.rel (%p171) target = $region28
      $region27: #{se_module.1} parent=11 // pred_region
        _
      $region28: #{se_module.1} parent=11 // pred_fallthru
        _
    $region12: #{se_module.1} parent=5 // pred_fallthru
      _
    %p174 = scmp.lt.s32.totalorder %s11, 2
    // Predicated region
    $region29: #{se_module.1} parent=5 // pred_check
      %p175 = pneg %p174
    $region30: #{se_module.1} parent=5 // pred_check_branch
      %177 = sbr.rel (%p175) target = $region32
    $region31: #{se_module.1} parent=5 // pred_region
      // Predicated region
      $region33: #{se_module.1} parent=31 // pred_check
        %p178 = pneg %p31
      $region34: #{se_module.1} parent=31 // pred_check_branch
        %180 = sbr.rel (%p178) target = $region36
      $region35: #{se_module.1} parent=31 // pred_region
        %s181 = smul.u32 2, %s11
        %p182 = scmp.lt.s32.totalorder %s181, 3
        %s183 = scalar_select %p182, %s181, 3
        %s184 = smul.addr %s183, 32
        %s185 = smul.addr %s184, 8
        %s186 = scalar_lea.vmem %s0, %s185
        %s187 = smul.u32 2, %s11
      $region36: #{se_module.1} parent=31 // pred_fallthru
        _
    $region32: #{se_module.1} parent=5 // pred_fallthru
      _
    %p188 = scmp.le.s32.totalorder 1, %s11
    %p189 = scmp.lt.s32.totalorder %s11, 3
    %p190 = pnand %p188, %p189
    %p191 = pneg %p190
    // Predicated region
    $region37: #{se_module.1} parent=5 // pred_check
      _
    $region38: #{se_module.1} parent=5 // pred_check_branch
      %193 = sbr.rel (%p190) target = $region40
    $region39: #{se_module.1} parent=5 // pred_region
      %s194 = ssub.s32 %s11, 1
      %s195 = smul.u32 2, %s16
      %p196 = scmp.lt.s32.totalorder %s195, 3
      %s197 = scalar_select %p196, %s195, 3
      %s198 = smul.addr %s197, 32
      %s199 = smul.addr %s198, 8
      %s200 = scalar_lea.vmem %s0, %s199
      %p201 = pneg %p37
      %p202 = pneg %p34
      %p203 = pneg %p58
      %p204 = pneg %p55
      %p205 = pneg %p79
      %p206 = pneg %p76
      %p207 = pneg %p100
      %p208 = pneg %p97
      %p209 = pneg %p121
      %p210 = pneg %p118
      %p211 = pneg %p147
      %p212 = pneg %p144
      %s213 = smul.u32 2, %s16
      %p214 = scmp.lt.s32.totalorder %s213, 3
      %s215 = scalar_select %p214, %s213, 3
      %s216 = smul.addr %s215, 32
      %s217 = smul.addr %s216, 8
      %s218 = scalar_lea.vmem %s5, %s217
      %s219 = smul.u32 2, %s16
      %p220 = scmp.lt.s32.totalorder %s219, 3
      %s221 = scalar_select %p220, %s219, 3
      %s222 = smul.addr %s221, 32
      %s223 = smul.addr %s222, 8
      %s224 = scalar_lea.vmem %s0, %s223
      %s225 = smul.u32 2, %s16
      %s226 = smul.u32 2, %s16
      %p227 = scmp.lt.s32.totalorder %s226, 3
      %s228 = scalar_select %p227, %s226, 3
      %s229 = smul.addr %s228, 32
      %s230 = smul.addr %s229, 8
      %s231 = scalar_lea.vmem %s5, %s230
      %s232 = smul.u32 2, %s16
      %v233 = vld [vmem:[%s224] sm:$0xff]
      %v234 = vld [vmem:[%s224 + $0x8] sm:$0xff]
      %v235 = vld [vmem:[%s224 + $0x10] sm:$0xff]
      %v236 = vld [vmem:[%s224 + $0x18] sm:$0xff]
      %v237 = vld [vmem:[%s224 + $0x20] sm:$0xff]
      %v238 = vld [vmem:[%s224 + $0x28] sm:$0xff]
      %v239 = vld [vmem:[%s224 + $0x30] sm:$0xff]
      %v240 = vld [vmem:[%s224 + $0x38] sm:$0xff]
      %v241 = vld [vmem:[%s224 + $0x40] sm:$0xff]
      %v242 = vld [vmem:[%s224 + $0x48] sm:$0xff]
      %v243 = vld [vmem:[%s224 + $0x50] sm:$0xff]
      %v244 = vld [vmem:[%s224 + $0x58] sm:$0xff]
      %v245 = vld [vmem:[%s224 + $0x60] sm:$0xff]
      %v246 = vld [vmem:[%s224 + $0x68] sm:$0xff]
      %v247 = vld [vmem:[%s224 + $0x70] sm:$0xff]
      %v248 = vld [vmem:[%s224 + $0x78] sm:$0xff]
      %v249 = vld [vmem:[%s224 + $0x80] sm:$0xff]
      %v250 = vld [vmem:[%s224 + $0x88] sm:$0xff]
      %v251 = vld [vmem:[%s224 + $0x90] sm:$0xff]
      %v252 = vld [vmem:[%s224 + $0x98] sm:$0xff]
      %v253 = vld [vmem:[%s224 + $0xa0] sm:$0xff]
      %v254 = vld [vmem:[%s224 + $0xa8] sm:$0xff]
      %v255 = vld [vmem:[%s224 + $0xb0] sm:$0xff]
      %v256 = vld [vmem:[%s224 + $0xb8] sm:$0xff]
      %v257 = vld [vmem:[%s224 + $0xc0] sm:$0xff]
      %v258 = vld [vmem:[%s224 + $0xc8] sm:$0xff]
      %v259 = vld [vmem:[%s224 + $0xd0] sm:$0xff]
      %v260 = vld [vmem:[%s224 + $0xd8] sm:$0xff]
      %v261 = vld [vmem:[%s224 + $0xe0] sm:$0xff]
      %v262 = vld [vmem:[%s224 + $0xe8] sm:$0xff]
      %v263 = vld [vmem:[%s224 + $0xf0] sm:$0xff]
      %v264 = vld [vmem:[%s224 + $0xf8] sm:$0xff]
      %v265 = vld [vmem:[%s224 + $0x100] sm:$0xff]
      %v266 = vld [vmem:[%s224 + $0x108] sm:$0xff]
      %v267 = vld [vmem:[%s224 + $0x110] sm:$0xff]
      %v268 = vld [vmem:[%s224 + $0x118] sm:$0xff]
      %v269 = vld [vmem:[%s224 + $0x120] sm:$0xff]
      %v270 = vld [vmem:[%s224 + $0x128] sm:$0xff]
      %v271 = vld [vmem:[%s224 + $0x130] sm:$0xff]
      %v272 = vld [vmem:[%s224 + $0x138] sm:$0xff]
      %v273 = vld [vmem:[%s224 + $0x140] sm:$0xff]
      %v274 = vld [vmem:[%s224 + $0x148] sm:$0xff]
      %v275 = vld [vmem:[%s224 + $0x150] sm:$0xff]
      %v276 = vld [vmem:[%s224 + $0x158] sm:$0xff]
      %v277 = vld [vmem:[%s224 + $0x160] sm:$0xff]
      %v278 = vld [vmem:[%s224 + $0x168] sm:$0xff]
      %v279 = vld [vmem:[%s224 + $0x170] sm:$0xff]
      %v280 = vld [vmem:[%s224 + $0x178] sm:$0xff]
      %v281 = vld [vmem:[%s224 + $0x180] sm:$0xff]
      %v282 = vld [vmem:[%s224 + $0x188] sm:$0xff]
      %v283 = vld [vmem:[%s224 + $0x190] sm:$0xff]
      %v284 = vld [vmem:[%s224 + $0x198] sm:$0xff]
      %v285 = vld [vmem:[%s224 + $0x1a0] sm:$0xff]
      %v286 = vld [vmem:[%s224 + $0x1a8] sm:$0xff]
      %v287 = vld [vmem:[%s224 + $0x1b0] sm:$0xff]
      %v288 = vld [vmem:[%s224 + $0x1b8] sm:$0xff]
      %v289 = vld [vmem:[%s224 + $0x1c0] sm:$0xff]
      %v290 = vld [vmem:[%s224 + $0x1c8] sm:$0xff]
      %v291 = vld [vmem:[%s224 + $0x1d0] sm:$0xff]
      %v292 = vld [vmem:[%s224 + $0x1d8] sm:$0xff]
      %v293 = vld [vmem:[%s224 + $0x1e0] sm:$0xff]
      %v294 = vld [vmem:[%s224 + $0x1e8] sm:$0xff]
      %v295 = vld [vmem:[%s224 + $0x1f0] sm:$0xff]
      %v296 = vld [vmem:[%s224 + $0x1f8] sm:$0xff]
      %vm297 = vcmask 523264
      %v298 = vsel %vm297, %v233, 0.0
      %299 = vadd.xlane.f32.xlu0 %v298
      %v300 = vpop.xlane.xlu0 %299
      %v301 = vsel %vm297, %v234, 0.0
      %302 = vadd.xlane.f32.xlu0 %v301
      %v303 = vpop.xlane.xlu0 %302
      %v304 = vsel %vm297, %v235, 0.0
      %305 = vadd.xlane.f32.xlu0 %v304
      %v306 = vpop.xlane.xlu0 %305
      %v307 = vsel %vm297, %v236, 0.0
      %308 = vadd.xlane.f32.xlu0 %v307
      %v309 = vpop.xlane.xlu0 %308
      %v310 = vsel %vm297, %v237, 0.0
      %311 = vadd.xlane.f32.xlu0 %v310
      %v312 = vpop.xlane.xlu0 %311
      %v313 = vsel %vm297, %v238, 0.0
      %314 = vadd.xlane.f32.xlu0 %v313
      %v315 = vpop.xlane.xlu0 %314
      %v316 = vsel %vm297, %v239, 0.0
      %317 = vadd.xlane.f32.xlu0 %v316
      %v318 = vpop.xlane.xlu0 %317
      %v319 = vsel %vm297, %v240, 0.0
      %320 = vadd.xlane.f32.xlu0 %v319
      %v321 = vpop.xlane.xlu0 %320
      %v322 = vsel %vm297, %v241, 0.0
      %323 = vadd.xlane.f32.xlu0 %v322
      %v324 = vpop.xlane.xlu0 %323
      %v325 = vsel %vm297, %v242, 0.0
      %326 = vadd.xlane.f32.xlu0 %v325
      %v327 = vpop.xlane.xlu0 %326
      %v328 = vsel %vm297, %v243, 0.0
      %329 = vadd.xlane.f32.xlu0 %v328
      %v330 = vpop.xlane.xlu0 %329
      %v331 = vsel %vm297, %v244, 0.0
      %332 = vadd.xlane.f32.xlu0 %v331
      %v333 = vpop.xlane.xlu0 %332
      %v334 = vsel %vm297, %v245, 0.0
      %335 = vadd.xlane.f32.xlu0 %v334
      %v336 = vpop.xlane.xlu0 %335
      %v337 = vsel %vm297, %v246, 0.0
      %338 = vadd.xlane.f32.xlu0 %v337
      %v339 = vpop.xlane.xlu0 %338
      %v340 = vsel %vm297, %v247, 0.0
      %341 = vadd.xlane.f32.xlu0 %v340
      %v342 = vpop.xlane.xlu0 %341
      %v343 = vsel %vm297, %v248, 0.0
      %344 = vadd.xlane.f32.xlu0 %v343
      %v345 = vpop.xlane.xlu0 %344
      %v346 = vsel %vm297, %v249, 0.0
      %347 = vadd.xlane.f32.xlu0 %v346
      %v348 = vpop.xlane.xlu0 %347
      %v349 = vsel %vm297, %v250, 0.0
      %350 = vadd.xlane.f32.xlu0 %v349
      %v351 = vpop.xlane.xlu0 %350
      %v352 = vsel %vm297, %v251, 0.0
      %353 = vadd.xlane.f32.xlu0 %v352
      %v354 = vpop.xlane.xlu0 %353
      %v355 = vsel %vm297, %v252, 0.0
      %356 = vadd.xlane.f32.xlu0 %v355
      %v357 = vpop.xlane.xlu0 %356
      %v358 = vsel %vm297, %v253, 0.0
      %359 = vadd.xlane.f32.xlu0 %v358
      %v360 = vpop.xlane.xlu0 %359
      %v361 = vsel %vm297, %v254, 0.0
      %362 = vadd.xlane.f32.xlu0 %v361
      %v363 = vpop.xlane.xlu0 %362
      %v364 = vsel %vm297, %v255, 0.0
      %365 = vadd.xlane.f32.xlu0 %v364
      %v366 = vpop.xlane.xlu0 %365
      %v367 = vsel %vm297, %v256, 0.0
      %368 = vadd.xlane.f32.xlu0 %v367
      %v369 = vpop.xlane.xlu0 %368
      %v370 = vsel %vm297, %v257, 0.0
      %371 = vadd.xlane.f32.xlu0 %v370
      %v372 = vpop.xlane.xlu0 %371
      %v373 = vsel %vm297, %v258, 0.0
      %374 = vadd.xlane.f32.xlu0 %v373
      %v375 = vpop.xlane.xlu0 %374
      %v376 = vsel %vm297, %v259, 0.0
      %377 = vadd.xlane.f32.xlu0 %v376
      %v378 = vpop.xlane.xlu0 %377
      %v379 = vsel %vm297, %v260, 0.0
      %380 = vadd.xlane.f32.xlu0 %v379
      %v381 = vpop.xlane.xlu0 %380
      %v382 = vsel %vm297, %v261, 0.0
      %383 = vadd.xlane.f32.xlu0 %v382
      %v384 = vpop.xlane.xlu0 %383
      %v385 = vsel %vm297, %v262, 0.0
      %386 = vadd.xlane.f32.xlu0 %v385
      %v387 = vpop.xlane.xlu0 %386
      %v388 = vsel %vm297, %v263, 0.0
      %389 = vadd.xlane.f32.xlu0 %v388
      %v390 = vpop.xlane.xlu0 %389
      %v391 = vsel %vm297, %v264, 0.0
      %392 = vadd.xlane.f32.xlu0 %v391
      %v393 = vpop.xlane.xlu0 %392
      %v394 = vsel %vm297, %v265, 0.0
      %395 = vadd.xlane.f32.xlu0 %v394
      %v396 = vpop.xlane.xlu0 %395
      %v397 = vsel %vm297, %v266, 0.0
      %398 = vadd.xlane.f32.xlu0 %v397
      %v399 = vpop.xlane.xlu0 %398
      %v400 = vsel %vm297, %v267, 0.0
      %401 = vadd.xlane.f32.xlu0 %v400
      %v402 = vpop.xlane.xlu0 %401
      %v403 = vsel %vm297, %v268, 0.0
      %404 = vadd.xlane.f32.xlu0 %v403
      %v405 = vpop.xlane.xlu0 %404
      %v406 = vsel %vm297, %v269, 0.0
      %407 = vadd.xlane.f32.xlu0 %v406
      %v408 = vpop.xlane.xlu0 %407
      %v409 = vsel %vm297, %v270, 0.0
      %410 = vadd.xlane.f32.xlu0 %v409
      %v411 = vpop.xlane.xlu0 %410
      %v412 = vsel %vm297, %v271, 0.0
      %413 = vadd.xlane.f32.xlu0 %v412
      %v414 = vpop.xlane.xlu0 %413
      %v415 = vsel %vm297, %v272, 0.0
      %416 = vadd.xlane.f32.xlu0 %v415
      %v417 = vpop.xlane.xlu0 %416
      %v418 = vsel %vm297, %v273, 0.0
      %419 = vadd.xlane.f32.xlu0 %v418
      %v420 = vpop.xlane.xlu0 %419
      %v421 = vsel %vm297, %v274, 0.0
      %422 = vadd.xlane.f32.xlu0 %v421
      %v423 = vpop.xlane.xlu0 %422
      %v424 = vsel %vm297, %v275, 0.0
      %425 = vadd.xlane.f32.xlu0 %v424
      %v426 = vpop.xlane.xlu0 %425
      %v427 = vsel %vm297, %v276, 0.0
      %428 = vadd.xlane.f32.xlu0 %v427
      %v429 = vpop.xlane.xlu0 %428
      %v430 = vsel %vm297, %v277, 0.0
      %431 = vadd.xlane.f32.xlu0 %v430
      %v432 = vpop.xlane.xlu0 %431
      %v433 = vsel %vm297, %v278, 0.0
      %434 = vadd.xlane.f32.xlu0 %v433
      %v435 = vpop.xlane.xlu0 %434
      %v436 = vsel %vm297, %v279, 0.0
      %437 = vadd.xlane.f32.xlu0 %v436
      %v438 = vpop.xlane.xlu0 %437
      %v439 = vsel %vm297, %v280, 0.0
      %440 = vadd.xlane.f32.xlu0 %v439
      %v441 = vpop.xlane.xlu0 %440
      %v442 = vsel %vm297, %v281, 0.0
      %443 = vadd.xlane.f32.xlu0 %v442
      %v444 = vpop.xlane.xlu0 %443
      %v445 = vsel %vm297, %v282, 0.0
      %446 = vadd.xlane.f32.xlu0 %v445
      %v447 = vpop.xlane.xlu0 %446
      %v448 = vsel %vm297, %v283, 0.0
      %449 = vadd.xlane.f32.xlu0 %v448
      %v450 = vpop.xlane.xlu0 %449
      %v451 = vsel %vm297, %v284, 0.0
      %452 = vadd.xlane.f32.xlu0 %v451
      %v453 = vpop.xlane.xlu0 %452
      %v454 = vsel %vm297, %v285, 0.0
      %455 = vadd.xlane.f32.xlu0 %v454
      %v456 = vpop.xlane.xlu0 %455
      %v457 = vsel %vm297, %v286, 0.0
      %458 = vadd.xlane.f32.xlu0 %v457
      %v459 = vpop.xlane.xlu0 %458
      %v460 = vsel %vm297, %v287, 0.0
      %461 = vadd.xlane.f32.xlu0 %v460
      %v462 = vpop.xlane.xlu0 %461
      %v463 = vsel %vm297, %v288, 0.0
      %464 = vadd.xlane.f32.xlu0 %v463
      %v465 = vpop.xlane.xlu0 %464
      %v466 = vsel %vm297, %v289, 0.0
      %467 = vadd.xlane.f32.xlu0 %v466
      %v468 = vpop.xlane.xlu0 %467
      %v469 = vsel %vm297, %v290, 0.0
      %470 = vadd.xlane.f32.xlu0 %v469
      %v471 = vpop.xlane.xlu0 %470
      %v472 = vsel %vm297, %v291, 0.0
      %473 = vadd.xlane.f32.xlu0 %v472
      %v474 = vpop.xlane.xlu0 %473
      %v475 = vsel %vm297, %v292, 0.0
      %476 = vadd.xlane.f32.xlu0 %v475
      %v477 = vpop.xlane.xlu0 %476
      %v478 = vsel %vm297, %v293, 0.0
      %479 = vadd.xlane.f32.xlu0 %v478
      %v480 = vpop.xlane.xlu0 %479
      %v481 = vsel %vm297, %v294, 0.0
      %482 = vadd.xlane.f32.xlu0 %v481
      %v483 = vpop.xlane.xlu0 %482
      %v484 = vsel %vm297, %v295, 0.0
      %485 = vadd.xlane.f32.xlu0 %v484
      %v486 = vpop.xlane.xlu0 %485
      %v487 = vsel %vm297, %v296, 0.0
      %488 = vadd.xlane.f32.xlu0 %v487
      %v489 = vpop.xlane.xlu0 %488
      %v490 = vmul.f32 %v300, 0.015625
      %v491 = vmul.f32 %v303, 0.015625
      %v492 = vmul.f32 %v306, 0.015625
      %v493 = vmul.f32 %v309, 0.015625
      %v494 = vmul.f32 %v312, 0.015625
      %v495 = vmul.f32 %v315, 0.015625
      %v496 = vmul.f32 %v318, 0.015625
      %v497 = vmul.f32 %v321, 0.015625
      %v498 = vmul.f32 %v324, 0.015625
      %v499 = vmul.f32 %v327, 0.015625
      %v500 = vmul.f32 %v330, 0.015625
      %v501 = vmul.f32 %v333, 0.015625
      %v502 = vmul.f32 %v336, 0.015625
      %v503 = vmul.f32 %v339, 0.015625
      %v504 = vmul.f32 %v342, 0.015625
      %v505 = vmul.f32 %v345, 0.015625
      %v506 = vmul.f32 %v348, 0.015625
      %v507 = vmul.f32 %v351, 0.015625
      %v508 = vmul.f32 %v354, 0.015625
      %v509 = vmul.f32 %v357, 0.015625
      %v510 = vmul.f32 %v360, 0.015625
      %v511 = vmul.f32 %v363, 0.015625
      %v512 = vmul.f32 %v366, 0.015625
      %v513 = vmul.f32 %v369, 0.015625
      %v514 = vmul.f32 %v372, 0.015625
      %v515 = vmul.f32 %v375, 0.015625
      %v516 = vmul.f32 %v378, 0.015625
      %v517 = vmul.f32 %v381, 0.015625
      %v518 = vmul.f32 %v384, 0.015625
      %v519 = vmul.f32 %v387, 0.015625
      %v520 = vmul.f32 %v390, 0.015625
      %v521 = vmul.f32 %v393, 0.015625
      %v522 = vmul.f32 %v396, 0.015625
      %v523 = vmul.f32 %v399, 0.015625
      %v524 = vmul.f32 %v402, 0.015625
      %v525 = vmul.f32 %v405, 0.015625
      %v526 = vmul.f32 %v408, 0.015625
      %v527 = vmul.f32 %v411, 0.015625
      %v528 = vmul.f32 %v414, 0.015625
      %v529 = vmul.f32 %v417, 0.015625
      %v530 = vmul.f32 %v420, 0.015625
      %v531 = vmul.f32 %v423, 0.015625
      %v532 = vmul.f32 %v426, 0.015625
      %v533 = vmul.f32 %v429, 0.015625
      %v534 = vmul.f32 %v432, 0.015625
      %v535 = vmul.f32 %v435, 0.015625
      %v536 = vmul.f32 %v438, 0.015625
      %v537 = vmul.f32 %v441, 0.015625
      %v538 = vmul.f32 %v444, 0.015625
      %v539 = vmul.f32 %v447, 0.015625
      %v540 = vmul.f32 %v450, 0.015625
      %v541 = vmul.f32 %v453, 0.015625
      %v542 = vmul.f32 %v456, 0.015625
      %v543 = vmul.f32 %v459, 0.015625
      %v544 = vmul.f32 %v462, 0.015625
      %v545 = vmul.f32 %v465, 0.015625
      %v546 = vmul.f32 %v468, 0.015625
      %v547 = vmul.f32 %v471, 0.015625
      %v548 = vmul.f32 %v474, 0.015625
      %v549 = vmul.f32 %v477, 0.015625
      %v550 = vmul.f32 %v480, 0.015625
      %v551 = vmul.f32 %v483, 0.015625
      %v552 = vmul.f32 %v486, 0.015625
      %v553 = vmul.f32 %v489, 0.015625
      %v554 = vld [vmem:[%s1] sm:$0xff]
      %v555 = vld [vmem:[%s1 + $0x8] sm:$0xff]
      %v556 = vld [vmem:[%s1 + $0x10] sm:$0xff]
      %v557 = vld [vmem:[%s1 + $0x18] sm:$0xff]
      %v558 = vld [vmem:[%s1 + $0x20] sm:$0xff]
      %v559 = vld [vmem:[%s1 + $0x28] sm:$0xff]
      %v560 = vld [vmem:[%s1 + $0x30] sm:$0xff]
      %v561 = vld [vmem:[%s1 + $0x38] sm:$0xff]
      %v562 = vld [vmem:[%s1 + $0x40] sm:$0xff]
      %v563 = vld [vmem:[%s1 + $0x48] sm:$0xff]
      %v564 = vld [vmem:[%s1 + $0x50] sm:$0xff]
      %v565 = vld [vmem:[%s1 + $0x58] sm:$0xff]
      %v566 = vld [vmem:[%s1 + $0x60] sm:$0xff]
      %v567 = vld [vmem:[%s1 + $0x68] sm:$0xff]
      %v568 = vld [vmem:[%s1 + $0x70] sm:$0xff]
      %v569 = vld [vmem:[%s1 + $0x78] sm:$0xff]
      %v570 = vld [vmem:[%s1 + $0x80] sm:$0xff]
      %v571 = vld [vmem:[%s1 + $0x88] sm:$0xff]
      %v572 = vld [vmem:[%s1 + $0x90] sm:$0xff]
      %v573 = vld [vmem:[%s1 + $0x98] sm:$0xff]
      %v574 = vld [vmem:[%s1 + $0xa0] sm:$0xff]
      %v575 = vld [vmem:[%s1 + $0xa8] sm:$0xff]
      %v576 = vld [vmem:[%s1 + $0xb0] sm:$0xff]
      %v577 = vld [vmem:[%s1 + $0xb8] sm:$0xff]
      %v578 = vld [vmem:[%s1 + $0xc0] sm:$0xff]
      %v579 = vld [vmem:[%s1 + $0xc8] sm:$0xff]
      %v580 = vld [vmem:[%s1 + $0xd0] sm:$0xff]
      %v581 = vld [vmem:[%s1 + $0xd8] sm:$0xff]
      %v582 = vld [vmem:[%s1 + $0xe0] sm:$0xff]
      %v583 = vld [vmem:[%s1 + $0xe8] sm:$0xff]
      %v584 = vld [vmem:[%s1 + $0xf0] sm:$0xff]
      %v585 = vld [vmem:[%s1 + $0xf8] sm:$0xff]
      %v586 = vld [vmem:[%s2] sm:$0x1]
      %v588 = vperm.slane %v586, 0
      %v654 = vlaneseq
      %v655 = vand.u32 %v654, 127
      %v656 = vperm.slane %v490, %v655
      %v657 = vadd.s32 %v655, 4294967288
      %v658 = vperm.slane %v491, %v657
      %vm659 = vcmask 130112
      %v660 = vsel %vm659, %v658, %v656
      %v661 = vadd.s32 %v655, 4294967280
      %v662 = vperm.slane %v492, %v661
      %vm663 = vcmask 195712
      %v664 = vsel %vm663, %v662, %v660
      %v665 = vadd.s32 %v655, 4294967272
      %v666 = vperm.slane %v493, %v665
      %vm667 = vcmask 261312
      %v668 = vsel %vm667, %v666, %v664
      %v669 = vadd.s32 %v655, 4294967264
      %v670 = vperm.slane %v494, %v669
      %vm671 = vcmask 326912
      %v672 = vsel %vm671, %v670, %v668
      %v673 = vadd.s32 %v655, 4294967256
      %v674 = vperm.slane %v495, %v673
      %vm675 = vcmask 392512
      %v676 = vsel %vm675, %v674, %v672
      %v677 = vadd.s32 %v655, 4294967248
      %v678 = vperm.slane %v496, %v677
      %vm679 = vcmask 458112
      %v680 = vsel %vm679, %v678, %v676
      %v681 = vadd.s32 %v655, 4294967240
      %v682 = vperm.slane %v497, %v681
      %vm683 = vcmask 523712
      %v684 = vsel %vm683, %v682, %v680
      %v685 = vadd.s32 %v655, 4294967232
      %v686 = vperm.slane %v498, %v685
      %vm687 = vcmask 589312
      %v688 = vsel %vm687, %v686, %v684
      %v689 = vadd.s32 %v655, 4294967224
      %v690 = vperm.slane %v499, %v689
      %vm691 = vcmask 654912
      %v692 = vsel %vm691, %v690, %v688
      %v693 = vadd.s32 %v655, 4294967216
      %v694 = vperm.slane %v500, %v693
      %vm695 = vcmask 720512
      %v696 = vsel %vm695, %v694, %v692
      %v697 = vadd.s32 %v655, 4294967208
      %v698 = vperm.slane %v501, %v697
      %vm699 = vcmask 786112
      %v700 = vsel %vm699, %v698, %v696
      %v701 = vadd.s32 %v655, 4294967200
      %v702 = vperm.slane %v502, %v701
      %vm703 = vcmask 851712
      %v704 = vsel %vm703, %v702, %v700
      %v705 = vadd.s32 %v655, 4294967192
      %v706 = vperm.slane %v503, %v705
      %vm707 = vcmask 917312
      %v708 = vsel %vm707, %v706, %v704
      %v709 = vadd.s32 %v655, 4294967184
      %v710 = vperm.slane %v504, %v709
      %vm711 = vcmask 982912
      %v712 = vsel %vm711, %v710, %v708
      %v713 = vadd.s32 %v655, 4294967176
      %v714 = vperm.slane %v505, %v713
      %vm715 = vcmask 1048512
      %v716 = vsel %vm715, %v714, %v712
      %v717 = vperm.slane %v506, %v655
      %v718 = vperm.slane %v507, %v657
      %v719 = vsel %vm659, %v718, %v717
      %v720 = vperm.slane %v508, %v661
      %v721 = vsel %vm663, %v720, %v719
      %v722 = vperm.slane %v509, %v665
      %v723 = vsel %vm667, %v722, %v721
      %v724 = vperm.slane %v510, %v669
      %v725 = vsel %vm671, %v724, %v723
      %v726 = vperm.slane %v511, %v673
      %v727 = vsel %vm675, %v726, %v725
      %v728 = vperm.slane %v512, %v677
      %v729 = vsel %vm679, %v728, %v727
      %v730 = vperm.slane %v513, %v681
      %v731 = vsel %vm683, %v730, %v729
      %v732 = vperm.slane %v514, %v685
      %v733 = vsel %vm687, %v732, %v731
      %v734 = vperm.slane %v515, %v689
      %v735 = vsel %vm691, %v734, %v733
      %v736 = vperm.slane %v516, %v693
      %v737 = vsel %vm695, %v736, %v735
      %v738 = vperm.slane %v517, %v697
      %v739 = vsel %vm699, %v738, %v737
      %v740 = vperm.slane %v518, %v701
      %v741 = vsel %vm703, %v740, %v739
      %v742 = vperm.slane %v519, %v705
      %v743 = vsel %vm707, %v742, %v741
      %v744 = vperm.slane %v520, %v709
      %v745 = vsel %vm711, %v744, %v743
      %v746 = vperm.slane %v521, %v713
      %v747 = vsel %vm715, %v746, %v745
      %v748 = vperm.slane %v522, %v655
      %v749 = vperm.slane %v523, %v657
      %v750 = vsel %vm659, %v749, %v748
      %v751 = vperm.slane %v524, %v661
      %v752 = vsel %vm663, %v751, %v750
      %v753 = vperm.slane %v525, %v665
      %v754 = vsel %vm667, %v753, %v752
      %v755 = vperm.slane %v526, %v669
      %v756 = vsel %vm671, %v755, %v754
      %v757 = vperm.slane %v527, %v673
      %v758 = vsel %vm675, %v757, %v756
      %v759 = vperm.slane %v528, %v677
      %v760 = vsel %vm679, %v759, %v758
      %v761 = vperm.slane %v529, %v681
      %v762 = vsel %vm683, %v761, %v760
      %v763 = vperm.slane %v530, %v685
      %v764 = vsel %vm687, %v763, %v762
      %v765 = vperm.slane %v531, %v689
      %v766 = vsel %vm691, %v765, %v764
      %v767 = vperm.slane %v532, %v693
      %v768 = vsel %vm695, %v767, %v766
      %v769 = vperm.slane %v533, %v697
      %v770 = vsel %vm699, %v769, %v768
      %v771 = vperm.slane %v534, %v701
      %v772 = vsel %vm703, %v771, %v770
      %v773 = vperm.slane %v535, %v705
      %v774 = vsel %vm707, %v773, %v772
      %v775 = vperm.slane %v536, %v709
      %v776 = vsel %vm711, %v775, %v774
      %v777 = vperm.slane %v537, %v713
      %v778 = vsel %vm715, %v777, %v776
      %v779 = vperm.slane %v538, %v655
      %v780 = vperm.slane %v539, %v657
      %v781 = vsel %vm659, %v780, %v779
      %v782 = vperm.slane %v540, %v661
      %v783 = vsel %vm663, %v782, %v781
      %v784 = vperm.slane %v541, %v665
      %v785 = vsel %vm667, %v784, %v783
      %v786 = vperm.slane %v542, %v669
      %v787 = vsel %vm671, %v786, %v785
      %v788 = vperm.slane %v543, %v673
      %v789 = vsel %vm675, %v788, %v787
      %v790 = vperm.slane %v544, %v677
      %v791 = vsel %vm679, %v790, %v789
      %v792 = vperm.slane %v545, %v681
      %v793 = vsel %vm683, %v792, %v791
      %v794 = vperm.slane %v546, %v685
      %v795 = vsel %vm687, %v794, %v793
      %v796 = vperm.slane %v547, %v689
      %v797 = vsel %vm691, %v796, %v795
      %v798 = vperm.slane %v548, %v693
      %v799 = vsel %vm695, %v798, %v797
      %v800 = vperm.slane %v549, %v697
      %v801 = vsel %vm699, %v800, %v799
      %v802 = vperm.slane %v550, %v701
      %v803 = vsel %vm703, %v802, %v801
      %v804 = vperm.slane %v551, %v705
      %v805 = vsel %vm707, %v804, %v803
      %v806 = vperm.slane %v552, %v709
      %v807 = vsel %vm711, %v806, %v805
      %v808 = vperm.slane %v553, %v713
      %v809 = vsel %vm715, %v808, %v807
      %vm810 = vcmask 1041409
      %v811 = vsel %vm810, %v778, %v716
      %v812 = vsel %vm810, %v809, %v747
      %815 = vmatpush.msra.mxu0 %v569
      %816 = vmatpush.msra.mxu0 %v568
      %817 = vmatpush.msra.mxu0 %v567
      %818 = vmatpush.msra.mxu0 %v566
      %819 = vmatpush.msra.mxu0 %v565
      %820 = vmatpush.msra.mxu0 %v564
      %821 = vmatpush.msra.mxu0 %v563
      %822 = vmatpush.msra.mxu0 %v562
      %823 = vmatpush.msra.mxu0 %v561
      %824 = vmatpush.msra.mxu0 %v560
      %825 = vmatpush.msra.mxu0 %v559
      %826 = vmatpush.msra.mxu0 %v558
      %827 = vmatpush.msra.mxu0 %v557
      %828 = vmatpush.msra.mxu0 %v556
      %829 = vmatpush.msra.mxu0 %v555
      %830 = vmatpush.msra.mxu0 %v554
      %831 = vmatmul.f32.gmra.mxu0 %v811
      %v832 = vpop.f32.mrf.mxu0
      %v833 = vadd.f32 %v588, %v832
      %834 = vdwg.mxu0
      %835 = vmatpush.msra.mxu0 %v585
      %836 = vmatpush.msra.mxu0 %v584
      %837 = vmatpush.msra.mxu0 %v583
      %838 = vmatpush.msra.mxu0 %v582
      %839 = vmatpush.msra.mxu0 %v581
      %840 = vmatpush.msra.mxu0 %v580
      %841 = vmatpush.msra.mxu0 %v579
      %842 = vmatpush.msra.mxu0 %v578
      %843 = vmatpush.msra.mxu0 %v577
      %844 = vmatpush.msra.mxu0 %v576
      %845 = vmatpush.msra.mxu0 %v575
      %846 = vmatpush.msra.mxu0 %v574
      %847 = vmatpush.msra.mxu0 %v573
      %848 = vmatpush.msra.mxu0 %v572
      %849 = vmatpush.msra.mxu0 %v571
      %850 = vmatpush.msra.mxu0 %v570
      %851 = vmatmul.f32.gmra.mxu0 %v812
      %v852 = vpop.f32.mrf.mxu0
      %v853 = vadd.f32 %v833, %v852
      %854 = vdwg.mxu0
      %v855 = vmax.f32 %v853, 0.0
      %v856 = vld [vmem:[%s3] sm:$0xff]
      %v857 = vld [vmem:[%s3 + $0x8] sm:$0xff]
      %v858 = vld [vmem:[%s3 + $0x10] sm:$0xff]
      %v859 = vld [vmem:[%s3 + $0x18] sm:$0xff]
      %v860 = vld [vmem:[%s4] sm:$0x3]
      %v862 = vperm.slane %v860, 0
      %v863 = vperm.slane %v860, 1
      %vm866 = vcmask 130048
      %v868 = vsel %vm866, %v855, 0
      %870 = vmatpush.msra.mxu0 0.0
      %871 = vmatpush.msra.mxu0 0.0
      %872 = vmatpush.msra.mxu0 0.0
      %873 = vmatpush.msra.mxu0 0.0
      %874 = vmatpush.msra.mxu0 0.0
      %875 = vmatpush.msra.mxu0 0.0
      %876 = vmatpush.msra.mxu0 0.0
      %877 = vmatpush.msra.mxu0 0.0
      %878 = vmatpush.msra.mxu0 0.0
      %879 = vmatpush.msra.mxu0 0.0
      %880 = vmatpush.msra.mxu0 0.0
      %881 = vmatpush.msra.mxu0 0.0
      %882 = vmatpush.msra.mxu0 0.0
      %883 = vmatpush.msra.mxu0 0.0
      %884 = vmatpush.msra.mxu0 %v858
      %885 = vmatpush.msra.mxu0 %v856
      %886 = vmatmul.f32.gmra.mxu0 %v868
      %v887 = vpop.f32.mrf.mxu0
      %v888 = vadd.f32 %v862, %v887
      %889 = vdwg.mxu0
      %890 = vmatpush.msra.mxu0 0.0
      %891 = vmatpush.msra.mxu0 0.0
      %892 = vmatpush.msra.mxu0 0.0
      %893 = vmatpush.msra.mxu0 0.0
      %894 = vmatpush.msra.mxu0 0.0
      %895 = vmatpush.msra.mxu0 0.0
      %896 = vmatpush.msra.mxu0 0.0
      %897 = vmatpush.msra.mxu0 0.0
      %898 = vmatpush.msra.mxu0 0.0
      %899 = vmatpush.msra.mxu0 0.0
      %900 = vmatpush.msra.mxu0 0.0
      %901 = vmatpush.msra.mxu0 0.0
      %902 = vmatpush.msra.mxu0 0.0
      %903 = vmatpush.msra.mxu0 0.0
      %904 = vmatpush.msra.mxu0 %v859
      %905 = vmatpush.msra.mxu0 %v857
      %906 = vmatmul.f32.gmra.mxu0 %v868
      %v907 = vpop.f32.mrf.mxu0
      %v908 = vadd.f32 %v863, %v907
      %909 = vdwg.mxu0
      %v910 = vxor.u32 %v888, 2147483648
      %v911 = vxor.u32 %v908, 2147483648
      %v912 = vmul.f32 %v910, 1.442695
      %v913 = vpow.pop %v912
      %v914 = vmul.f32 %v911, 1.442695
      %v915 = vpow.pop %v914
      %v916 = vadd.f32 %v913, 1.0
      %v917 = vadd.f32 %v915, 1.0
      %v918 = vrcp.pop %v916
      %v919 = vmul.f32 %v916, %v918
      %v920 = vsub.f32 1.0, %v919
      %v921 = vmul.f32 %v918, %v920
      %v922 = vadd.f32 %v918, %v921
      %vm923 = vweird.f32 %v916
      %vm924 = vweird.f32 %v918
      %vm925 = vmor %vm923, %vm924
      %v926 = vsel %vm925, %v918, %v922
      %v927 = vand.u32 2147483647, %v916
      %vm928 = vcmp.eq.f32.partialorder %v927, 8.507059e+37
      %v929 = vand.u32 %v916, 2147483648
      %v930 = vor.u32 1.1754944e-38, %v929
      %v931 = vsel %vm928, %v930, %v926
      %v932 = vmul.f32 1.0, %v931
      %v933 = vrcp.pop %v917
      %v934 = vmul.f32 %v917, %v933
      %v935 = vsub.f32 1.0, %v934
      %v936 = vmul.f32 %v933, %v935
      %v937 = vadd.f32 %v933, %v936
      %vm938 = vweird.f32 %v917
      %vm939 = vweird.f32 %v933
      %vm940 = vmor %vm938, %vm939
      %v941 = vsel %vm940, %v933, %v937
      %v942 = vand.u32 2147483647, %v917
      %vm943 = vcmp.eq.f32.partialorder %v942, 8.507059e+37
      %v944 = vand.u32 %v917, 2147483648
      %v945 = vor.u32 1.1754944e-38, %v944
      %v946 = vsel %vm943, %v945, %v941
      %v947 = vmul.f32 1.0, %v946
      %v948 = vperm.slane %v932, 0
      %v949 = vlaneseq
      %v950 = vshrl.u32 %v949, 7
      %952 = vset.pattern.permute.xlu0 %v950
      %953 = vperm.xlu0 %952, %v948
      %v954 = vpop.permute.xlu0 %953
      %v955 = vlaneseq
      %v956 = vshrl.u32 %v955, 7
      %v957 = vadd.s32 %v956, 8
      %958 = vset.pattern.permute.xlu0 %v957
      %959 = vperm.xlu0 %958, %v948
      %v960 = vpop.permute.xlu0 %959
      %v961 = vlaneseq
      %v962 = vshrl.u32 %v961, 7
      %v963 = vadd.s32 %v962, 16
      %964 = vset.pattern.permute.xlu0 %v963
      %965 = vperm.xlu0 %964, %v948
      %v966 = vpop.permute.xlu0 %965
      %v967 = vlaneseq
      %v968 = vshrl.u32 %v967, 7
      %v969 = vadd.s32 %v968, 24
      %970 = vset.pattern.permute.xlu0 %v969
      %971 = vperm.xlu0 %970, %v948
      %v972 = vpop.permute.xlu0 %971
      %v973 = vlaneseq
      %v974 = vshrl.u32 %v973, 7
      %v975 = vadd.s32 %v974, 32
      %976 = vset.pattern.permute.xlu0 %v975
      %977 = vperm.xlu0 %976, %v948
      %v978 = vpop.permute.xlu0 %977
      %v979 = vlaneseq
      %v980 = vshrl.u32 %v979, 7
      %v981 = vadd.s32 %v980, 40
      %982 = vset.pattern.permute.xlu0 %v981
      %983 = vperm.xlu0 %982, %v948
      %v984 = vpop.permute.xlu0 %983
      %v985 = vlaneseq
      %v986 = vshrl.u32 %v985, 7
      %v987 = vadd.s32 %v986, 48
      %988 = vset.pattern.permute.xlu0 %v987
      %989 = vperm.xlu0 %988, %v948
      %v990 = vpop.permute.xlu0 %989
      %v991 = vlaneseq
      %v992 = vshrl.u32 %v991, 7
      %v993 = vadd.s32 %v992, 56
      %994 = vset.pattern.permute.xlu0 %v993
      %995 = vperm.xlu0 %994, %v948
      %v996 = vpop.permute.xlu0 %995
      %v997 = vlaneseq
      %v998 = vshrl.u32 %v997, 7
      %v999 = vadd.s32 %v998, 64
      %1000 = vset.pattern.permute.xlu0 %v999
      %1001 = vperm.xlu0 %1000, %v948
      %v1002 = vpop.permute.xlu0 %1001
      %v1003 = vlaneseq
      %v1004 = vshrl.u32 %v1003, 7
      %v1005 = vadd.s32 %v1004, 72
      %1006 = vset.pattern.permute.xlu0 %v1005
      %1007 = vperm.xlu0 %1006, %v948
      %v1008 = vpop.permute.xlu0 %1007
      %v1009 = vlaneseq
      %v1010 = vshrl.u32 %v1009, 7
      %v1011 = vadd.s32 %v1010, 80
      %1012 = vset.pattern.permute.xlu0 %v1011
      %1013 = vperm.xlu0 %1012, %v948
      %v1014 = vpop.permute.xlu0 %1013
      %v1015 = vlaneseq
      %v1016 = vshrl.u32 %v1015, 7
      %v1017 = vadd.s32 %v1016, 88
      %1018 = vset.pattern.permute.xlu0 %v1017
      %1019 = vperm.xlu0 %1018, %v948
      %v1020 = vpop.permute.xlu0 %1019
      %v1021 = vlaneseq
      %v1022 = vshrl.u32 %v1021, 7
      %v1023 = vadd.s32 %v1022, 96
      %1024 = vset.pattern.permute.xlu0 %v1023
      %1025 = vperm.xlu0 %1024, %v948
      %v1026 = vpop.permute.xlu0 %1025
      %v1027 = vlaneseq
      %v1028 = vshrl.u32 %v1027, 7
      %v1029 = vadd.s32 %v1028, 104
      %1030 = vset.pattern.permute.xlu0 %v1029
      %1031 = vperm.xlu0 %1030, %v948
      %v1032 = vpop.permute.xlu0 %1031
      %v1033 = vlaneseq
      %v1034 = vshrl.u32 %v1033, 7
      %v1035 = vadd.s32 %v1034, 112
      %1036 = vset.pattern.permute.xlu0 %v1035
      %1037 = vperm.xlu0 %1036, %v948
      %v1038 = vpop.permute.xlu0 %1037
      %v1039 = vlaneseq
      %v1040 = vshrl.u32 %v1039, 7
      %v1041 = vadd.s32 %v1040, 120
      %1042 = vset.pattern.permute.xlu0 %v1041
      %1043 = vperm.xlu0 %1042, %v948
      %v1044 = vpop.permute.xlu0 %1043
      %v1045 = vperm.slane %v947, 0
      %v1046 = vlaneseq
      %v1047 = vshrl.u32 %v1046, 7
      %1049 = vset.pattern.permute.xlu0 %v1047
      %1050 = vperm.xlu0 %1049, %v1045
      %v1051 = vpop.permute.xlu0 %1050
      %v1052 = vlaneseq
      %v1053 = vshrl.u32 %v1052, 7
      %v1054 = vadd.s32 %v1053, 8
      %1055 = vset.pattern.permute.xlu0 %v1054
      %1056 = vperm.xlu0 %1055, %v1045
      %v1057 = vpop.permute.xlu0 %1056
      %v1058 = vlaneseq
      %v1059 = vshrl.u32 %v1058, 7
      %v1060 = vadd.s32 %v1059, 16
      %1061 = vset.pattern.permute.xlu0 %v1060
      %1062 = vperm.xlu0 %1061, %v1045
      %v1063 = vpop.permute.xlu0 %1062
      %v1064 = vlaneseq
      %v1065 = vshrl.u32 %v1064, 7
      %v1066 = vadd.s32 %v1065, 24
      %1067 = vset.pattern.permute.xlu0 %v1066
      %1068 = vperm.xlu0 %1067, %v1045
      %v1069 = vpop.permute.xlu0 %1068
      %v1070 = vlaneseq
      %v1071 = vshrl.u32 %v1070, 7
      %v1072 = vadd.s32 %v1071, 32
      %1073 = vset.pattern.permute.xlu0 %v1072
      %1074 = vperm.xlu0 %1073, %v1045
      %v1075 = vpop.permute.xlu0 %1074
      %v1076 = vlaneseq
      %v1077 = vshrl.u32 %v1076, 7
      %v1078 = vadd.s32 %v1077, 40
      %1079 = vset.pattern.permute.xlu0 %v1078
      %1080 = vperm.xlu0 %1079, %v1045
      %v1081 = vpop.permute.xlu0 %1080
      %v1082 = vlaneseq
      %v1083 = vshrl.u32 %v1082, 7
      %v1084 = vadd.s32 %v1083, 48
      %1085 = vset.pattern.permute.xlu0 %v1084
      %1086 = vperm.xlu0 %1085, %v1045
      %v1087 = vpop.permute.xlu0 %1086
      %v1088 = vlaneseq
      %v1089 = vshrl.u32 %v1088, 7
      %v1090 = vadd.s32 %v1089, 56
      %1091 = vset.pattern.permute.xlu0 %v1090
      %1092 = vperm.xlu0 %1091, %v1045
      %v1093 = vpop.permute.xlu0 %1092
      %v1094 = vlaneseq
      %v1095 = vshrl.u32 %v1094, 7
      %v1096 = vadd.s32 %v1095, 64
      %1097 = vset.pattern.permute.xlu0 %v1096
      %1098 = vperm.xlu0 %1097, %v1045
      %v1099 = vpop.permute.xlu0 %1098
      %v1100 = vlaneseq
      %v1101 = vshrl.u32 %v1100, 7
      %v1102 = vadd.s32 %v1101, 72
      %1103 = vset.pattern.permute.xlu0 %v1102
      %1104 = vperm.xlu0 %1103, %v1045
      %v1105 = vpop.permute.xlu0 %1104
      %v1106 = vlaneseq
      %v1107 = vshrl.u32 %v1106, 7
      %v1108 = vadd.s32 %v1107, 80
      %1109 = vset.pattern.permute.xlu0 %v1108
      %1110 = vperm.xlu0 %1109, %v1045
      %v1111 = vpop.permute.xlu0 %1110
      %v1112 = vlaneseq
      %v1113 = vshrl.u32 %v1112, 7
      %v1114 = vadd.s32 %v1113, 88
      %1115 = vset.pattern.permute.xlu0 %v1114
      %1116 = vperm.xlu0 %1115, %v1045
      %v1117 = vpop.permute.xlu0 %1116
      %v1118 = vlaneseq
      %v1119 = vshrl.u32 %v1118, 7
      %v1120 = vadd.s32 %v1119, 96
      %1121 = vset.pattern.permute.xlu0 %v1120
      %1122 = vperm.xlu0 %1121, %v1045
      %v1123 = vpop.permute.xlu0 %1122
      %v1124 = vlaneseq
      %v1125 = vshrl.u32 %v1124, 7
      %v1126 = vadd.s32 %v1125, 104
      %1127 = vset.pattern.permute.xlu0 %v1126
      %1128 = vperm.xlu0 %1127, %v1045
      %v1129 = vpop.permute.xlu0 %1128
      %v1130 = vlaneseq
      %v1131 = vshrl.u32 %v1130, 7
      %v1132 = vadd.s32 %v1131, 112
      %1133 = vset.pattern.permute.xlu0 %v1132
      %1134 = vperm.xlu0 %1133, %v1045
      %v1135 = vpop.permute.xlu0 %1134
      %v1136 = vlaneseq
      %v1137 = vshrl.u32 %v1136, 7
      %v1138 = vadd.s32 %v1137, 120
      %1139 = vset.pattern.permute.xlu0 %v1138
      %1140 = vperm.xlu0 %1139, %v1045
      %v1141 = vpop.permute.xlu0 %1140
      %v1142 = vperm.slane %v932, 1
      %v1143 = vlaneseq
      %v1144 = vshrl.u32 %v1143, 7
      %1146 = vset.pattern.permute.xlu0 %v1144
      %1147 = vperm.xlu0 %1146, %v1142
      %v1148 = vpop.permute.xlu0 %1147
      %v1149 = vlaneseq
      %v1150 = vshrl.u32 %v1149, 7
      %v1151 = vadd.s32 %v1150, 8
      %1152 = vset.pattern.permute.xlu0 %v1151
      %1153 = vperm.xlu0 %1152, %v1142
      %v1154 = vpop.permute.xlu0 %1153
      %v1155 = vlaneseq
      %v1156 = vshrl.u32 %v1155, 7
      %v1157 = vadd.s32 %v1156, 16
      %1158 = vset.pattern.permute.xlu0 %v1157
      %1159 = vperm.xlu0 %1158, %v1142
      %v1160 = vpop.permute.xlu0 %1159
      %v1161 = vlaneseq
      %v1162 = vshrl.u32 %v1161, 7
      %v1163 = vadd.s32 %v1162, 24
      %1164 = vset.pattern.permute.xlu0 %v1163
      %1165 = vperm.xlu0 %1164, %v1142
      %v1166 = vpop.permute.xlu0 %1165
      %v1167 = vlaneseq
      %v1168 = vshrl.u32 %v1167, 7
      %v1169 = vadd.s32 %v1168, 32
      %1170 = vset.pattern.permute.xlu0 %v1169
      %1171 = vperm.xlu0 %1170, %v1142
      %v1172 = vpop.permute.xlu0 %1171
      %v1173 = vlaneseq
      %v1174 = vshrl.u32 %v1173, 7
      %v1175 = vadd.s32 %v1174, 40
      %1176 = vset.pattern.permute.xlu0 %v1175
      %1177 = vperm.xlu0 %1176, %v1142
      %v1178 = vpop.permute.xlu0 %1177
      %v1179 = vlaneseq
      %v1180 = vshrl.u32 %v1179, 7
      %v1181 = vadd.s32 %v1180, 48
      %1182 = vset.pattern.permute.xlu0 %v1181
      %1183 = vperm.xlu0 %1182, %v1142
      %v1184 = vpop.permute.xlu0 %1183
      %v1185 = vlaneseq
      %v1186 = vshrl.u32 %v1185, 7
      %v1187 = vadd.s32 %v1186, 56
      %1188 = vset.pattern.permute.xlu0 %v1187
      %1189 = vperm.xlu0 %1188, %v1142
      %v1190 = vpop.permute.xlu0 %1189
      %v1191 = vlaneseq
      %v1192 = vshrl.u32 %v1191, 7
      %v1193 = vadd.s32 %v1192, 64
      %1194 = vset.pattern.permute.xlu0 %v1193
      %1195 = vperm.xlu0 %1194, %v1142
      %v1196 = vpop.permute.xlu0 %1195
      %v1197 = vlaneseq
      %v1198 = vshrl.u32 %v1197, 7
      %v1199 = vadd.s32 %v1198, 72
      %1200 = vset.pattern.permute.xlu0 %v1199
      %1201 = vperm.xlu0 %1200, %v1142
      %v1202 = vpop.permute.xlu0 %1201
      %v1203 = vlaneseq
      %v1204 = vshrl.u32 %v1203, 7
      %v1205 = vadd.s32 %v1204, 80
      %1206 = vset.pattern.permute.xlu0 %v1205
      %1207 = vperm.xlu0 %1206, %v1142
      %v1208 = vpop.permute.xlu0 %1207
      %v1209 = vlaneseq
      %v1210 = vshrl.u32 %v1209, 7
      %v1211 = vadd.s32 %v1210, 88
      %1212 = vset.pattern.permute.xlu0 %v1211
      %1213 = vperm.xlu0 %1212, %v1142
      %v1214 = vpop.permute.xlu0 %1213
      %v1215 = vlaneseq
      %v1216 = vshrl.u32 %v1215, 7
      %v1217 = vadd.s32 %v1216, 96
      %1218 = vset.pattern.permute.xlu0 %v1217
      %1219 = vperm.xlu0 %1218, %v1142
      %v1220 = vpop.permute.xlu0 %1219
      %v1221 = vlaneseq
      %v1222 = vshrl.u32 %v1221, 7
      %v1223 = vadd.s32 %v1222, 104
      %1224 = vset.pattern.permute.xlu0 %v1223
      %1225 = vperm.xlu0 %1224, %v1142
      %v1226 = vpop.permute.xlu0 %1225
      %v1227 = vlaneseq
      %v1228 = vshrl.u32 %v1227, 7
      %v1229 = vadd.s32 %v1228, 112
      %1230 = vset.pattern.permute.xlu0 %v1229
      %1231 = vperm.xlu0 %1230, %v1142
      %v1232 = vpop.permute.xlu0 %1231
      %v1233 = vlaneseq
      %v1234 = vshrl.u32 %v1233, 7
      %v1235 = vadd.s32 %v1234, 120
      %1236 = vset.pattern.permute.xlu0 %v1235
      %1237 = vperm.xlu0 %1236, %v1142
      %v1238 = vpop.permute.xlu0 %1237
      %v1239 = vperm.slane %v947, 1
      %v1240 = vlaneseq
      %v1241 = vshrl.u32 %v1240, 7
      %1243 = vset.pattern.permute.xlu0 %v1241
      %1244 = vperm.xlu0 %1243, %v1239
      %v1245 = vpop.permute.xlu0 %1244
      %v1246 = vlaneseq
      %v1247 = vshrl.u32 %v1246, 7
      %v1248 = vadd.s32 %v1247, 8
      %1249 = vset.pattern.permute.xlu0 %v1248
      %1250 = vperm.xlu0 %1249, %v1239
      %v1251 = vpop.permute.xlu0 %1250
      %v1252 = vlaneseq
      %v1253 = vshrl.u32 %v1252, 7
      %v1254 = vadd.s32 %v1253, 16
      %1255 = vset.pattern.permute.xlu0 %v1254
      %1256 = vperm.xlu0 %1255, %v1239
      %v1257 = vpop.permute.xlu0 %1256
      %v1258 = vlaneseq
      %v1259 = vshrl.u32 %v1258, 7
      %v1260 = vadd.s32 %v1259, 24
      %1261 = vset.pattern.permute.xlu0 %v1260
      %1262 = vperm.xlu0 %1261, %v1239
      %v1263 = vpop.permute.xlu0 %1262
      %v1264 = vlaneseq
      %v1265 = vshrl.u32 %v1264, 7
      %v1266 = vadd.s32 %v1265, 32
      %1267 = vset.pattern.permute.xlu0 %v1266
      %1268 = vperm.xlu0 %1267, %v1239
      %v1269 = vpop.permute.xlu0 %1268
      %v1270 = vlaneseq
      %v1271 = vshrl.u32 %v1270, 7
      %v1272 = vadd.s32 %v1271, 40
      %1273 = vset.pattern.permute.xlu0 %v1272
      %1274 = vperm.xlu0 %1273, %v1239
      %v1275 = vpop.permute.xlu0 %1274
      %v1276 = vlaneseq
      %v1277 = vshrl.u32 %v1276, 7
      %v1278 = vadd.s32 %v1277, 48
      %1279 = vset.pattern.permute.xlu0 %v1278
      %1280 = vperm.xlu0 %1279, %v1239
      %v1281 = vpop.permute.xlu0 %1280
      %v1282 = vlaneseq
      %v1283 = vshrl.u32 %v1282, 7
      %v1284 = vadd.s32 %v1283, 56
      %1285 = vset.pattern.permute.xlu0 %v1284
      %1286 = vperm.xlu0 %1285, %v1239
      %v1287 = vpop.permute.xlu0 %1286
      %v1288 = vlaneseq
      %v1289 = vshrl.u32 %v1288, 7
      %v1290 = vadd.s32 %v1289, 64
      %1291 = vset.pattern.permute.xlu0 %v1290
      %1292 = vperm.xlu0 %1291, %v1239
      %v1293 = vpop.permute.xlu0 %1292
      %v1294 = vlaneseq
      %v1295 = vshrl.u32 %v1294, 7
      %v1296 = vadd.s32 %v1295, 72
      %1297 = vset.pattern.permute.xlu0 %v1296
      %1298 = vperm.xlu0 %1297, %v1239
      %v1299 = vpop.permute.xlu0 %1298
      %v1300 = vlaneseq
      %v1301 = vshrl.u32 %v1300, 7
      %v1302 = vadd.s32 %v1301, 80
      %1303 = vset.pattern.permute.xlu0 %v1302
      %1304 = vperm.xlu0 %1303, %v1239
      %v1305 = vpop.permute.xlu0 %1304
      %v1306 = vlaneseq
      %v1307 = vshrl.u32 %v1306, 7
      %v1308 = vadd.s32 %v1307, 88
      %1309 = vset.pattern.permute.xlu0 %v1308
      %1310 = vperm.xlu0 %1309, %v1239
      %v1311 = vpop.permute.xlu0 %1310
      %v1312 = vlaneseq
      %v1313 = vshrl.u32 %v1312, 7
      %v1314 = vadd.s32 %v1313, 96
      %1315 = vset.pattern.permute.xlu0 %v1314
      %1316 = vperm.xlu0 %1315, %v1239
      %v1317 = vpop.permute.xlu0 %1316
      %v1318 = vlaneseq
      %v1319 = vshrl.u32 %v1318, 7
      %v1320 = vadd.s32 %v1319, 104
      %1321 = vset.pattern.permute.xlu0 %v1320
      %1322 = vperm.xlu0 %1321, %v1239
      %v1323 = vpop.permute.xlu0 %1322
      %v1324 = vlaneseq
      %v1325 = vshrl.u32 %v1324, 7
      %v1326 = vadd.s32 %v1325, 112
      %1327 = vset.pattern.permute.xlu0 %v1326
      %1328 = vperm.xlu0 %1327, %v1239
      %v1329 = vpop.permute.xlu0 %1328
      %v1330 = vlaneseq
      %v1331 = vshrl.u32 %v1330, 7
      %v1332 = vadd.s32 %v1331, 120
      %1333 = vset.pattern.permute.xlu0 %v1332
      %1334 = vperm.xlu0 %1333, %v1239
      %v1335 = vpop.permute.xlu0 %1334
      %v1336 = vmul.f32 %v233, %v954
      %v1337 = vmul.f32 %v234, %v960
      %v1338 = vmul.f32 %v235, %v966
      %v1339 = vmul.f32 %v236, %v972
      %v1340 = vmul.f32 %v237, %v978
      %v1341 = vmul.f32 %v238, %v984
      %v1342 = vmul.f32 %v239, %v990
      %v1343 = vmul.f32 %v240, %v996
      %v1344 = vmul.f32 %v241, %v1002
      %v1345 = vmul.f32 %v242, %v1008
      %v1346 = vmul.f32 %v243, %v1014
      %v1347 = vmul.f32 %v244, %v1020
      %v1348 = vmul.f32 %v245, %v1026
      %v1349 = vmul.f32 %v246, %v1032
      %v1350 = vmul.f32 %v247, %v1038
      %v1351 = vmul.f32 %v248, %v1044
      %v1352 = vmul.f32 %v249, %v1051
      %v1353 = vmul.f32 %v250, %v1057
      %v1354 = vmul.f32 %v251, %v1063
      %v1355 = vmul.f32 %v252, %v1069
      %v1356 = vmul.f32 %v253, %v1075
      %v1357 = vmul.f32 %v254, %v1081
      %v1358 = vmul.f32 %v255, %v1087
      %v1359 = vmul.f32 %v256, %v1093
      %v1360 = vmul.f32 %v257, %v1099
      %v1361 = vmul.f32 %v258, %v1105
      %v1362 = vmul.f32 %v259, %v1111
      %v1363 = vmul.f32 %v260, %v1117
      %v1364 = vmul.f32 %v261, %v1123
      %v1365 = vmul.f32 %v262, %v1129
      %v1366 = vmul.f32 %v263, %v1135
      %v1367 = vmul.f32 %v264, %v1141
      %v1368 = vmul.f32 %v265, %v1148
      %v1369 = vmul.f32 %v266, %v1154
      %v1370 = vmul.f32 %v267, %v1160
      %v1371 = vmul.f32 %v268, %v1166
      %v1372 = vmul.f32 %v269, %v1172
      %v1373 = vmul.f32 %v270, %v1178
      %v1374 = vmul.f32 %v271, %v1184
      %v1375 = vmul.f32 %v272, %v1190
      %v1376 = vmul.f32 %v273, %v1196
      %v1377 = vmul.f32 %v274, %v1202
      %v1378 = vmul.f32 %v275, %v1208
      %v1379 = vmul.f32 %v276, %v1214
      %v1380 = vmul.f32 %v277, %v1220
      %v1381 = vmul.f32 %v278, %v1226
      %v1382 = vmul.f32 %v279, %v1232
      %v1383 = vmul.f32 %v280, %v1238
      %v1384 = vmul.f32 %v281, %v1245
      %v1385 = vmul.f32 %v282, %v1251
      %v1386 = vmul.f32 %v283, %v1257
      %v1387 = vmul.f32 %v284, %v1263
      %v1388 = vmul.f32 %v285, %v1269
      %v1389 = vmul.f32 %v286, %v1275
      %v1390 = vmul.f32 %v287, %v1281
      %v1391 = vmul.f32 %v288, %v1287
      %v1392 = vmul.f32 %v289, %v1293
      %v1393 = vmul.f32 %v290, %v1299
      %v1394 = vmul.f32 %v291, %v1305
      %v1395 = vmul.f32 %v292, %v1311
      %v1396 = vmul.f32 %v293, %v1317
      %v1397 = vmul.f32 %v294, %v1323
      %v1398 = vmul.f32 %v295, %v1329
      %v1399 = vmul.f32 %v296, %v1335
      %1400 = vst.msk [vmem:[%s231] sm:$0xff] %vm297, %v1336
      %1401 = vst.msk [vmem:[%s231 + $0x8] sm:$0xff] %vm297, %v1337
      %1402 = vst.msk [vmem:[%s231 + $0x10] sm:$0xff] %vm297, %v1338
      %1403 = vst.msk [vmem:[%s231 + $0x18] sm:$0xff] %vm297, %v1339
      %1404 = vst.msk [vmem:[%s231 + $0x20] sm:$0xff] %vm297, %v1340
      %1405 = vst.msk [vmem:[%s231 + $0x28] sm:$0xff] %vm297, %v1341
      %1406 = vst.msk [vmem:[%s231 + $0x30] sm:$0xff] %vm297, %v1342
      %1407 = vst.msk [vmem:[%s231 + $0x38] sm:$0xff] %vm297, %v1343
      %1408 = vst.msk [vmem:[%s231 + $0x40] sm:$0xff] %vm297, %v1344
      %1409 = vst.msk [vmem:[%s231 + $0x48] sm:$0xff] %vm297, %v1345
      %1410 = vst.msk [vmem:[%s231 + $0x50] sm:$0xff] %vm297, %v1346
      %1411 = vst.msk [vmem:[%s231 + $0x58] sm:$0xff] %vm297, %v1347
      %1412 = vst.msk [vmem:[%s231 + $0x60] sm:$0xff] %vm297, %v1348
      %1413 = vst.msk [vmem:[%s231 + $0x68] sm:$0xff] %vm297, %v1349
      %1414 = vst.msk [vmem:[%s231 + $0x70] sm:$0xff] %vm297, %v1350
      %1415 = vst.msk [vmem:[%s231 + $0x78] sm:$0xff] %vm297, %v1351
      %1416 = vst.msk [vmem:[%s231 + $0x80] sm:$0xff] %vm297, %v1352
      %1417 = vst.msk [vmem:[%s231 + $0x88] sm:$0xff] %vm297, %v1353
      %1418 = vst.msk [vmem:[%s231 + $0x90] sm:$0xff] %vm297, %v1354
      %1419 = vst.msk [vmem:[%s231 + $0x98] sm:$0xff] %vm297, %v1355
      %1420 = vst.msk [vmem:[%s231 + $0xa0] sm:$0xff] %vm297, %v1356
      %1421 = vst.msk [vmem:[%s231 + $0xa8] sm:$0xff] %vm297, %v1357
      %1422 = vst.msk [vmem:[%s231 + $0xb0] sm:$0xff] %vm297, %v1358
      %1423 = vst.msk [vmem:[%s231 + $0xb8] sm:$0xff] %vm297, %v1359
      %1424 = vst.msk [vmem:[%s231 + $0xc0] sm:$0xff] %vm297, %v1360
      %1425 = vst.msk [vmem:[%s231 + $0xc8] sm:$0xff] %vm297, %v1361
      %1426 = vst.msk [vmem:[%s231 + $0xd0] sm:$0xff] %vm297, %v1362
      %1427 = vst.msk [vmem:[%s231 + $0xd8] sm:$0xff] %vm297, %v1363
      %1428 = vst.msk [vmem:[%s231 + $0xe0] sm:$0xff] %vm297, %v1364
      %1429 = vst.msk [vmem:[%s231 + $0xe8] sm:$0xff] %vm297, %v1365
      %1430 = vst.msk [vmem:[%s231 + $0xf0] sm:$0xff] %vm297, %v1366
      %1431 = vst.msk [vmem:[%s231 + $0xf8] sm:$0xff] %vm297, %v1367
      %1432 = vst.msk [vmem:[%s231 + $0x100] sm:$0xff] %vm297, %v1368
      %1433 = vst.msk [vmem:[%s231 + $0x108] sm:$0xff] %vm297, %v1369
      %1434 = vst.msk [vmem:[%s231 + $0x110] sm:$0xff] %vm297, %v1370
      %1435 = vst.msk [vmem:[%s231 + $0x118] sm:$0xff] %vm297, %v1371
      %1436 = vst.msk [vmem:[%s231 + $0x120] sm:$0xff] %vm297, %v1372
      %1437 = vst.msk [vmem:[%s231 + $0x128] sm:$0xff] %vm297, %v1373
      %1438 = vst.msk [vmem:[%s231 + $0x130] sm:$0xff] %vm297, %v1374
      %1439 = vst.msk [vmem:[%s231 + $0x138] sm:$0xff] %vm297, %v1375
      %1440 = vst.msk [vmem:[%s231 + $0x140] sm:$0xff] %vm297, %v1376
      %1441 = vst.msk [vmem:[%s231 + $0x148] sm:$0xff] %vm297, %v1377
      %1442 = vst.msk [vmem:[%s231 + $0x150] sm:$0xff] %vm297, %v1378
      %1443 = vst.msk [vmem:[%s231 + $0x158] sm:$0xff] %vm297, %v1379
      %1444 = vst.msk [vmem:[%s231 + $0x160] sm:$0xff] %vm297, %v1380
      %1445 = vst.msk [vmem:[%s231 + $0x168] sm:$0xff] %vm297, %v1381
      %1446 = vst.msk [vmem:[%s231 + $0x170] sm:$0xff] %vm297, %v1382
      %1447 = vst.msk [vmem:[%s231 + $0x178] sm:$0xff] %vm297, %v1383
      %1448 = vst.msk [vmem:[%s231 + $0x180] sm:$0xff] %vm297, %v1384
      %1449 = vst.msk [vmem:[%s231 + $0x188] sm:$0xff] %vm297, %v1385
      %1450 = vst.msk [vmem:[%s231 + $0x190] sm:$0xff] %vm297, %v1386
      %1451 = vst.msk [vmem:[%s231 + $0x198] sm:$0xff] %vm297, %v1387
      %1452 = vst.msk [vmem:[%s231 + $0x1a0] sm:$0xff] %vm297, %v1388
      %1453 = vst.msk [vmem:[%s231 + $0x1a8] sm:$0xff] %vm297, %v1389
      %1454 = vst.msk [vmem:[%s231 + $0x1b0] sm:$0xff] %vm297, %v1390
      %1455 = vst.msk [vmem:[%s231 + $0x1b8] sm:$0xff] %vm297, %v1391
      %1456 = vst.msk [vmem:[%s231 + $0x1c0] sm:$0xff] %vm297, %v1392
      %1457 = vst.msk [vmem:[%s231 + $0x1c8] sm:$0xff] %vm297, %v1393
      %1458 = vst.msk [vmem:[%s231 + $0x1d0] sm:$0xff] %vm297, %v1394
      %1459 = vst.msk [vmem:[%s231 + $0x1d8] sm:$0xff] %vm297, %v1395
      %1460 = vst.msk [vmem:[%s231 + $0x1e0] sm:$0xff] %vm297, %v1396
      %1461 = vst.msk [vmem:[%s231 + $0x1e8] sm:$0xff] %vm297, %v1397
      %1462 = vst.msk [vmem:[%s231 + $0x1f0] sm:$0xff] %vm297, %v1398
      %1463 = vst.msk [vmem:[%s231 + $0x1f8] sm:$0xff] %vm297, %v1399
      %s1464 = smul.u32 2, %s16
      %p1465 = scmp.lt.s32.totalorder %s1464, 3
      %s1466 = scalar_select %p1465, %s1464, 3
      %s1467 = smul.addr %s1466, 32
      %s1468 = smul.addr %s1467, 8
      %s1469 = scalar_lea.vmem %s5, %s1468
      // Predicated region
      $region41: #{se_module.1} parent=39 // pred_check
        %p1470 = pneg %p144
      $region42: #{se_module.1} parent=39 // pred_check_branch
        %1472 = sbr.rel (%p1470) target = $region44
      $region43: #{se_module.1} parent=39 // pred_region
        %s1473 = smul.u32 2, %s16
      $region44: #{se_module.1} parent=39 // pred_fallthru
        _
    $region40: #{se_module.1} parent=5 // pred_fallthru
      _
    %p1474 = scmp.le.s32.totalorder 2, %s11
    // Predicated region
    $region45: #{se_module.1} parent=5 // pred_check
      %p1475 = pneg %p1474
    $region46: #{se_module.1} parent=5 // pred_check_branch
      %1477 = sbr.rel (%p1475) target = $region48
    $region47: #{se_module.1} parent=5 // pred_region
      %s1478 = ssub.s32 %s11, 2
      // Predicated region
      $region49: #{se_module.1} parent=47 // pred_check
        %p1479 = pneg %p150
      $region50: #{se_module.1} parent=47 // pred_check_branch
        %1481 = sbr.rel (%p1479) target = $region52
      $region51: #{se_module.1} parent=47 // pred_region
        %s1482 = smul.u32 2, %s17
        %p1483 = scmp.lt.s32.totalorder %s1482, 3
        %s1484 = scalar_select %p1483, %s1482, 3
        %s1485 = smul.addr %s1484, 32
        %s1486 = smul.addr %s1485, 8
        %s1487 = scalar_lea.vmem %s5, %s1486
      $region52: #{se_module.1} parent=47 // pred_fallthru
        _
    $region48: #{se_module.1} parent=5 // pred_fallthru
      _
  $region6: #{se_module.1} parent=0 // loop_footer
    %s15 = sadd.s32 1, %s11
  $region7: #{se_module.1} parent=0 // loop_footer_branch
    %10 = sbr.rel target = $region3
  $region8: #{se_module.1} parent=0 // loop_exit
    _

</llo_original>
